<compile_context>
chip_gen: v7x
topology: tpu7x:2x2x1
jax: 0.10.0
libtpu: 0.0.40
codegen_flags: <defaults>
</compile_context>

<pallas_src>
import functools

import jax
import jax.numpy as jnp
import numpy as np
from jax.experimental import pallas as pl
from jax.experimental.pallas import tpu as pltpu


def _seg_loss_kernel(pred_ref, tgt_ref, cw_ref, out_ref, acc_ref, *,
                     ignore_index):
    """Grid = (frame_blocks, hw_blocks).  One step: F frames x T pixels.

    Writes per-frame weighted cross-entropy sums (over the full H*W) into
    out_ref (F, 1, 1) on the last HW step.
    """
    k = pl.program_id(1)

    @pl.when(k == 0)
    def _():
        acc_ref[...] = jnp.zeros_like(acc_ref)

    logits = pred_ref[...].astype(jnp.float32)      # (F, C, T)
    tgt = tgt_ref[...]                              # (F, 1, T) int32
    cw = cw_ref[...]                                # (C, 1)    f32

    # Numerically-stable log-softmax over the class (sublane) axis.
    m = jnp.max(logits, axis=1, keepdims=True)                       # (F,1,T)
    z = logits - m
    lse = jnp.log(jnp.sum(jnp.exp(z), axis=1, keepdims=True))        # (F,1,T)

    # Gather target logit / target class-weight via one-hot (no gather on TPU).
    class_ids = jax.lax.broadcasted_iota(jnp.int32, logits.shape, 1)  # (F,C,T)
    onehot = (class_ids == tgt).astype(jnp.float32)                   # (F,C,T)

    z_t = jnp.sum(onehot * z, axis=1, keepdims=True)                  # (F,1,T)
    w_t = jnp.sum(onehot * cw[None, :, :], axis=1, keepdims=True)     # (F,1,T)

    # ignore_index pixels contribute 0 (as in F.cross_entropy reduction='none').
    valid = (tgt != ignore_index).astype(jnp.float32)
    per_pix = -w_t * (z_t - lse) * valid                              # (F,1,T)

    acc_ref[...] += jnp.sum(per_pix, axis=2, keepdims=True)           # (F,1,1)

    @pl.when(k == pl.num_programs(1) - 1)
    def _():
        out_ref[...] = acc_ref[...]


def _pick_tiles(bs, c, hw, itemsize, budget_bytes):
    """Choose (F frames per block, T pixels per block) with F | bs, T | hw."""
    per_frame = c * hw * itemsize
    if per_frame <= budget_bytes:
        t_hw = hw
        f = int(max(1, min(bs, budget_bytes // per_frame)))
        while bs % f:
            f -= 1
    else:
        # Frame too large for one tile: tile the lane (H*W) axis instead.
        f = 1
        cands = [t for t in range(128, hw + 1, 128)
                 if hw % t == 0 and c * t * itemsize <= budget_bytes]
        t_hw = max(cands) if cands else hw
    return f, t_hw


def segmentation_loss(prediction, target, class_weights, *,
                      ignore_index=255, future_discount=1.0,
                      use_top_k=False, top_k_ratio=1.0,
                      tile_budget_bytes=2 * 1024 * 1024):
    """Forward pass of SegmentationLoss (use_top_k=False path)."""
    # TODO(synk): use_top_k / top_k_ratio < 1 (per-frame descending sort +
    # top-k truncation before the mean) has no clean Pallas equivalent here;
    # only the default use_top_k=False path is implemented.
    if use_top_k and top_k_ratio < 1.0:
        raise NotImplementedError("use_top_k with top_k_ratio < 1 not implemented")

    b, s, c, h, w = prediction.shape
    BS, HW = b * s, h * w

    # Note: the reference forward never forwards self.ignore_index to
    # F.cross_entropy; the masking below is only active if targets actually
    # contain `ignore_index`, which must lie outside the class range.
    assert not (0 <= int(ignore_index) < c), "ignore_index must be outside [0, C)"

    pred = prediction.reshape(BS, c, HW)                 # keep native dtype
    tgt = target.reshape(BS, 1, HW).astype(jnp.int32)
    cw = class_weights.astype(jnp.float32).reshape(c, 1)

    F, T = _pick_tiles(BS, c, HW, pred.dtype.itemsize, tile_budget_bytes)
    grid = (BS // F, HW // T)

    kernel = functools.partial(_seg_loss_kernel, ignore_index=int(ignore_index))

    frame_sums = pl.pallas_call(
        kernel,
        out_shape=jax.ShapeDtypeStruct((BS, 1, 1), jnp.float32),
        grid_spec=pltpu.PrefetchScalarGridSpec(
            num_scalar_prefetch=0,
            grid=grid,
            in_specs=[
                pl.BlockSpec((F, c, T), lambda j, k: (j, 0, k)),  # prediction
                pl.BlockSpec((F, 1, T), lambda j, k: (j, 0, k)),  # target
                pl.BlockSpec((c, 1), lambda j, k: (0, 0)),        # class wts
            ],
            out_specs=pl.BlockSpec((F, 1, 1), lambda j, k: (j, 0, 0)),
            scratch_shapes=[pltpu.VMEM((F, 1, 1), jnp.float32)],
        ),
        compiler_params=pltpu.CompilerParams(
            dimension_semantics=("parallel", "arbitrary"),
            vmem_limit_bytes=32 * 1024 * 1024),
    )(pred, tgt, cw)

    # Per-frame discount + mean applied in the wrapper (exact: the discount is
    # constant over each frame, so scaling frame sums == scaling pixels).
    frame_sums = frame_sums.reshape(b, s)
    disc = future_discount ** jnp.arange(s, dtype=jnp.float32)
    total = jnp.sum(frame_sums * disc[None, :])
    return total / jnp.float32(BS * HW)


def _reference(prediction, target, class_weights, future_discount):
    """Pure-JAX transcription of the PyTorch forward (use_top_k=False)."""
    b, s, c, h, w = prediction.shape
    pred = prediction.reshape(b * s, c, h * w).astype(jnp.float32)
    tgt = target.reshape(b * s, h * w)
    logp = jax.nn.log_softmax(pred, axis=1)
    onehot = jax.nn.one_hot(tgt, c, axis=1, dtype=jnp.float32)
    logp_t = jnp.sum(onehot * logp, axis=1)                    # (BS, HW)
    w_t = jnp.sum(onehot * class_weights.astype(jnp.float32)[None, :, None],
                  axis=1)                                      # (BS, HW)
    loss = -w_t * logp_t
    disc = future_discount ** jnp.arange(s, dtype=jnp.float32)
    loss = loss.reshape(b, s, h * w) * disc[None, :, None]
    return jnp.mean(loss)


if __name__ == "__main__":
    key = jax.random.PRNGKey(0)
    b, s, c, h, w = 2, 8, 4, 16, 16
    future_discount = 0.95

    k1, k2 = jax.random.split(key, 2)
    prediction = jax.random.normal(k1, (b, s, c, h, w), dtype=jnp.float32)
    target = jax.random.randint(k2, (b, s, h, w), 0, c, dtype=jnp.int32)
    class_weights = jnp.array([1.0, 2.0, 0.5, 1.5], dtype=jnp.float32)

    loss = segmentation_loss(prediction, target, class_weights,
                             ignore_index=255,
                             future_discount=future_discount)
    loss = jax.block_until_ready(loss)

    ref = _reference(prediction, target, class_weights, future_discount)
    assert np.allclose(np.asarray(loss), np.asarray(ref),
                       rtol=1e-4, atol=1e-6), (loss, ref)
    print("KERNEL_OK")
</pallas_src>

<mosaic_0001>
module attributes {stable_mosaic.version = 11 : i64} {
  func.func @_seg_loss_kernel(%arg0: i32, %arg1: i32, %arg2: memref<16x4x256xf32, #tpu.memory_space<vmem>>, %arg3: memref<16x1x256xi32, #tpu.memory_space<vmem>>, %arg4: memref<4x1xf32, #tpu.memory_space<vmem>>, %arg5: memref<16x1x1xf32, #tpu.memory_space<vmem>>, %arg6: memref<16x1x1xf32, #tpu.memory_space<vmem>>) attributes {dimension_semantics = [#tpu.dimension_semantics<parallel>, #tpu.dimension_semantics<arbitrary>], iteration_bounds = array<i64: 1, 1>, scalar_prefetch = 0 : i64, scratch_operands = 1 : i64, tpu.core_type = #tpu.core_type<tc>, window_params = [{transform_indices = @transform_0, window_bounds = array<i64: 16, 4, 256>}, {transform_indices = @transform_1, window_bounds = array<i64: 16, 1, 256>}, {pipeline_mode = #tpu.pipeline_mode<synchronous>, transform_indices = @transform_2, window_bounds = array<i64: 4, 1>}, {transform_indices = @transform_3, window_bounds = array<i64: 16, 1, 1>}]} {
    %c0_i32 = arith.constant 0 : i32
    %0 = arith.cmpi eq, %arg1, %c0_i32 : i32
    %1 = arith.extui %0 : i1 to i32
    %c0_i32_0 = arith.constant 0 : i32
    %2 = arith.cmpi ne, %1, %c0_i32_0 : i32
    scf.if %2 {
      %cst_21 = arith.constant 0.000000e+00 : f32
      %44 = vector.broadcast %cst_21 : f32 to vector<16x1x1xf32>
      %c0_22 = arith.constant 0 : index
      %c0_23 = arith.constant 0 : index
      %c0_24 = arith.constant 0 : index
      %45 = vector.load %arg6[%c0_22, %c0_23, %c0_24] : memref<16x1x1xf32, #tpu.memory_space<vmem>>, vector<16x1x1xf32>
      tpu.vector_store %arg6[%c0_22, %c0_23, %c0_24], %44 {strides = array<i32>} : memref<16x1x1xf32, #tpu.memory_space<vmem>>, vector<16x1x1xf32>,
    } else {
    }
    %c0 = arith.constant 0 : index
    %c0_1 = arith.constant 0 : index
    %c0_2 = arith.constant 0 : index
    %3 = vector.load %arg2[%c0, %c0_1, %c0_2] : memref<16x4x256xf32, #tpu.memory_space<vmem>>, vector<16x4x256xf32>
    %c0_3 = arith.constant 0 : index
    %c0_4 = arith.constant 0 : index
    %c0_5 = arith.constant 0 : index
    %4 = vector.load %arg3[%c0_3, %c0_4, %c0_5] : memref<16x1x256xi32, #tpu.memory_space<vmem>>, vector<16x1x256xi32>
    %c0_6 = arith.constant 0 : index
    %c0_7 = arith.constant 0 : index
    %5 = vector.load %arg4[%c0_6, %c0_7] : memref<4x1xf32, #tpu.memory_space<vmem>>, vector<4x1xf32>
    %cst = arith.constant dense<0xFF800000> : vector<16x256xf32>
    %6 = vector.multi_reduction <maximumf>, %3, %cst [1] : vector<16x4x256xf32> to vector<16x256xf32>
    %7 = vector.shape_cast %6 : vector<16x256xf32> to vector<16x1x256xf32>
    %8 = vector.broadcast %7 : vector<16x1x256xf32> to vector<16x4x256xf32>
    %9 = arith.subf %3, %8 : vector<16x4x256xf32>
    %10 = math.exp %9 : vector<16x4x256xf32>
    %cst_8 = arith.constant dense<0.000000e+00> : vector<16x256xf32>
    %11 = vector.multi_reduction <add>, %10, %cst_8 [1] : vector<16x4x256xf32> to vector<16x256xf32>
    %12 = vector.shape_cast %11 : vector<16x256xf32> to vector<16x1x256xf32>
    %13 = math.log %12 : vector<16x1x256xf32>
    %14 = tpu.iota {dimensions = array<i32: 1>} : vector<16x4x256xi32>
    %15 = vector.broadcast %4 : vector<16x1x256xi32> to vector<16x4x256xi32>
    %16 = arith.cmpi eq, %14, %15 : vector<16x4x256xi32>
    %17 = arith.extui %16 : vector<16x4x256xi1> to vector<16x4x256xi32>
    %18 = arith.sitofp %17 : vector<16x4x256xi32> to vector<16x4x256xf32>
    %19 = arith.mulf %18, %9 : vector<16x4x256xf32>
    %cst_9 = arith.constant dense<0.000000e+00> : vector<16x256xf32>
    %20 = vector.multi_reduction <add>, %19, %cst_9 [1] : vector<16x4x256xf32> to vector<16x256xf32>
    %21 = vector.shape_cast %20 : vector<16x256xf32> to vector<16x1x256xf32>
    %22 = vector.shape_cast %5 : vector<4x1xf32> to vector<1x4x1xf32>
    %23 = vector.broadcast %22 : vector<1x4x1xf32> to vector<16x4x256xf32>
    %24 = arith.mulf %18, %23 : vector<16x4x256xf32>
    %cst_10 = arith.constant dense<0.000000e+00> : vector<16x256xf32>
    %25 = vector.multi_reduction <add>, %24, %cst_10 [1] : vector<16x4x256xf32> to vector<16x256xf32>
    %26 = vector.shape_cast %25 : vector<16x256xf32> to vector<16x1x256xf32>
    %c255_i32 = arith.constant 255 : i32
    %27 = vector.broadcast %c255_i32 : i32 to vector<16x1x256xi32>
    %28 = arith.cmpi ne, %4, %27 : vector<16x1x256xi32>
    %29 = arith.extui %28 : vector<16x1x256xi1> to vector<16x1x256xi32>
    %30 = arith.sitofp %29 : vector<16x1x256xi32> to vector<16x1x256xf32>
    %cst_11 = arith.constant 0.000000e+00 : f32
    %31 = vector.broadcast %cst_11 : f32 to vector<16x1x256xf32>
    %32 = arith.subf %31, %26 : vector<16x1x256xf32>
    %33 = arith.subf %21, %13 : vector<16x1x256xf32>
    %34 = arith.mulf %32, %33 : vector<16x1x256xf32>
    %35 = arith.mulf %34, %30 : vector<16x1x256xf32>
    %c0_12 = arith.constant 0 : index
    %c0_13 = arith.constant 0 : index
    %c0_14 = arith.constant 0 : index
    %36 = vector.load %arg6[%c0_12, %c0_13, %c0_14] : memref<16x1x1xf32, #tpu.memory_space<vmem>>, vector<16x1x1xf32>
    %cst_15 = arith.constant dense<0.000000e+00> : vector<16x1xf32>
    %37 = vector.multi_reduction <add>, %35, %cst_15 [2] : vector<16x1x256xf32> to vector<16x1xf32>
    %38 = vector.shape_cast %37 : vector<16x1xf32> to vector<16x1x1xf32>
    %39 = arith.addf %36, %38 : vector<16x1x1xf32>
    %c0_16 = arith.constant 0 : index
    %c0_17 = arith.constant 0 : index
    %c0_18 = arith.constant 0 : index
    %40 = vector.load %arg6[%c0_16, %c0_17, %c0_18] : memref<16x1x1xf32, #tpu.memory_space<vmem>>, vector<16x1x1xf32>
    tpu.vector_store %arg6[%c0_16, %c0_17, %c0_18], %39 {strides = array<i32>} : memref<16x1x1xf32, #tpu.memory_space<vmem>>, vector<16x1x1xf32>,
    %c0_i32_19 = arith.constant 0 : i32
    %41 = arith.cmpi eq, %arg1, %c0_i32_19 : i32
    %42 = arith.extui %41 : i1 to i32
    %c0_i32_20 = arith.constant 0 : i32
    %43 = arith.cmpi ne, %42, %c0_i32_20 : i32
    scf.if %43 {
      %c0_21 = arith.constant 0 : index
      %c0_22 = arith.constant 0 : index
      %c0_23 = arith.constant 0 : index
      %44 = vector.load %arg6[%c0_21, %c0_22, %c0_23] : memref<16x1x1xf32, #tpu.memory_space<vmem>>, vector<16x1x1xf32>
      %c0_24 = arith.constant 0 : index
      %c0_25 = arith.constant 0 : index
      %c0_26 = arith.constant 0 : index
      %45 = vector.load %arg5[%c0_24, %c0_25, %c0_26] : memref<16x1x1xf32, #tpu.memory_space<vmem>>, vector<16x1x1xf32>
      tpu.vector_store %arg5[%c0_24, %c0_25, %c0_26], %44 {strides = array<i32>} : memref<16x1x1xf32, #tpu.memory_space<vmem>>, vector<16x1x1xf32>,
    } else {
    }
    return
  }
  func.func @transform_0(%arg0: i32, %arg1: i32) -> (i32, i32, i32) {
    %c0_i32 = arith.constant 0 : i32
    %c0_i32_0 = arith.constant 0 : i32
    return %arg0, %c0_i32, %arg1 : i32, i32, i32
  }
  func.func @transform_1(%arg0: i32, %arg1: i32) -> (i32, i32, i32) {
    %c0_i32 = arith.constant 0 : i32
    %c0_i32_0 = arith.constant 0 : i32
    return %arg0, %c0_i32, %arg1 : i32, i32, i32
  }
  func.func @transform_2(%arg0: i32, %arg1: i32) -> (i32, i32) {
    %c0_i32 = arith.constant 0 : i32
    %c0_i32_0 = arith.constant 0 : i32
    %c0_i32_1 = arith.constant 0 : i32
    return %c0_i32, %c0_i32_0 : i32, i32
  }
  func.func @transform_3(%arg0: i32, %arg1: i32) -> (i32, i32, i32) {
    %c0_i32 = arith.constant 0 : i32
    %c0_i32_0 = arith.constant 0 : i32
    %c0_i32_1 = arith.constant 0 : i32
    return %arg0, %c0_i32, %c0_i32_0 : i32, i32, i32
  }
}

</mosaic_0001>

<llo_original>
// kernel: tpu_custom_call.1
$region0: #{tpu_custom_call.1}
  #allocation0 [shape = 'u32[]', space=smem, size = 0x4, offset = 0x4, fixed_abs, tag = 'smem constant byte address 0x4 - core index']
  #allocation1 [shape = 'u32[144,128]{1,0:T(1,128)}', space=vmem, size = 0x12000, scoped, tag = 'internal scratch']
  #allocation2 [shape = 'f32[16,1,1]{2,1,0:T(1,128)}', space=vmem, size = 0x2000, scoped, tag = 'scratch operand']
  %s0 = inlined_call_operand.hbm [shape: f32[16,4,256], index: 0, kind: input, shape index: {}]
  %s1 = inlined_call_operand.hbm [shape: s32[16,1,256], index: 1, kind: input, shape index: {}]
  %s2 = inlined_call_operand.vmem [shape: f32[4,1], index: 2, kind: input, shape index: {}]
  %s3 = inlined_call_operand.vmem [shape: f32[16,1,1], index: 3, kind: output, shape index: {}]
  %s4 = sld [smem:[#allocation0]]
  $region38: #{tpu_custom_call.1} parent=0
    _
  %s6 = ssub.s32 1, %s4
  %s7 = scalar_select 0, %s6, %s4
  $region1: #{tpu_custom_call.1} parent=0
    #allocation3 [shape = 'u8[65536]{0}', space=vmem, size = 0x10000, scoped, tag = 'input window, operand 0, single buffered']
    #allocation4 [shape = 's32[1]{0}', space=sflag, size = 0x4, scoped, tag = 'scoped memory for tpu_custom_call.1']
    #allocation5 [shape = 'u8[16384]{0}', space=vmem, size = 0x4000, scoped, tag = 'input window, operand 1, single buffered']
    #allocation6 [shape = 's32[1]{0}', space=sflag, size = 0x4, scoped, tag = 'scoped memory for tpu_custom_call.1']
    %8 = vsyncpa [#allocation4], 0
    %9 = vsyncpa [#allocation6], 0
    // Predicated region
    $region2: #{tpu_custom_call.1} parent=1 // pred_check
      _
    $region3: #{tpu_custom_call.1} parent=1 // pred_check_branch
      %11 = sbr.rel (0) target = $region5
    $region4: #{tpu_custom_call.1} parent=1 // pred_region
      %s13 = ssub.s32 2048, 2048
      %14 = vsyncadd [#allocation4], %s13
      %s15 = sshll.u32 [#allocation3], 4
      %s16 = int_to_ptr.vmem [resolvable:$true] %s15
      %21 = dma.hbm_to_vmem [thread:$0]  %s0, 2048, %s16, [#allocation4], 128, 128, 8
    $region5: #{tpu_custom_call.1} parent=1 // pred_fallthru
      _
    // Predicated region
    $region6: #{tpu_custom_call.1} parent=1 // pred_check
      _
    $region7: #{tpu_custom_call.1} parent=1 // pred_check_branch
      %23 = sbr.rel (0) target = $region9
    $region8: #{tpu_custom_call.1} parent=1 // pred_region
      %s25 = ssub.s32 512, 512
      %26 = vsyncadd [#allocation6], %s25
      %s27 = sshll.u32 [#allocation5], 4
      %s28 = int_to_ptr.vmem [resolvable:$true] %s27
      %33 = dma.hbm_to_vmem [thread:$0]  %s1, 512, %s28, [#allocation6], 32, 32, 2
    $region9: #{tpu_custom_call.1} parent=1 // pred_fallthru
      _
    // Predicated region
    $region10: #{tpu_custom_call.1} parent=1 // pred_check
      _
    $region11: #{tpu_custom_call.1} parent=1 // pred_check_branch
      %35 = sbr.rel (0) target = $region13
    $region12: #{tpu_custom_call.1} parent=1 // pred_region
      _
    $region13: #{tpu_custom_call.1} parent=1 // pred_fallthru
      _
    // Predicated region
    $region14: #{tpu_custom_call.1} parent=1 // pred_check
      _
    $region15: #{tpu_custom_call.1} parent=1 // pred_check_branch
      %37 = sbr.rel (0) target = $region17
    $region16: #{tpu_custom_call.1} parent=1 // pred_region
      %38 = dma.done [#allocation4], 2048
    $region17: #{tpu_custom_call.1} parent=1 // pred_fallthru
      _
    // Predicated region
    $region18: #{tpu_custom_call.1} parent=1 // pred_check
      _
    $region19: #{tpu_custom_call.1} parent=1 // pred_check_branch
      %40 = sbr.rel (0) target = $region21
    $region20: #{tpu_custom_call.1} parent=1 // pred_region
      %41 = dma.done [#allocation6], 512
    $region21: #{tpu_custom_call.1} parent=1 // pred_fallthru
      _
    %p42 = scmp.eq.s32.totalorder 0, 0
    // Predicated region
    $region22: #{tpu_custom_call.1} parent=1 // pred_check
      %p43 = pneg %p42
    $region23: #{tpu_custom_call.1} parent=1 // pred_check_branch
      %45 = sbr.rel (%p43) target = $region25
    $region24: #{tpu_custom_call.1} parent=1 // pred_region
      %vm46 = vcmask 0
      %47 = vst.msk [vmem:[#allocation2] sm:$0x1] %vm46, 0.0
      %48 = vst.msk [vmem:[#allocation2 + $0x1] sm:$0x1] %vm46, 0.0
      %49 = vst.msk [vmem:[#allocation2 + $0x2] sm:$0x1] %vm46, 0.0
      %50 = vst.msk [vmem:[#allocation2 + $0x3] sm:$0x1] %vm46, 0.0
      %51 = vst.msk [vmem:[#allocation2 + $0x4] sm:$0x1] %vm46, 0.0
      %52 = vst.msk [vmem:[#allocation2 + $0x5] sm:$0x1] %vm46, 0.0
      %53 = vst.msk [vmem:[#allocation2 + $0x6] sm:$0x1] %vm46, 0.0
      %54 = vst.msk [vmem:[#allocation2 + $0x7] sm:$0x1] %vm46, 0.0
      %55 = vst.msk [vmem:[#allocation2 + $0x8] sm:$0x1] %vm46, 0.0
      %56 = vst.msk [vmem:[#allocation2 + $0x9] sm:$0x1] %vm46, 0.0
      %57 = vst.msk [vmem:[#allocation2 + $0xa] sm:$0x1] %vm46, 0.0
      %58 = vst.msk [vmem:[#allocation2 + $0xb] sm:$0x1] %vm46, 0.0
      %59 = vst.msk [vmem:[#allocation2 + $0xc] sm:$0x1] %vm46, 0.0
      %60 = vst.msk [vmem:[#allocation2 + $0xd] sm:$0x1] %vm46, 0.0
      %61 = vst.msk [vmem:[#allocation2 + $0xe] sm:$0x1] %vm46, 0.0
      %62 = vst.msk [vmem:[#allocation2 + $0xf] sm:$0x1] %vm46, 0.0
    $region25: #{tpu_custom_call.1} parent=1 // pred_fallthru
      _
    %v63 = vld [vmem:[#allocation3] sm:$0xff]
    %v64 = vld [vmem:[#allocation3 + $0x8] sm:$0xff]
    %v65 = vld [vmem:[#allocation3 + $0x10] sm:$0xff]
    %v66 = vld [vmem:[#allocation3 + $0x18] sm:$0xff]
    %v67 = vld [vmem:[#allocation3 + $0x20] sm:$0xff]
    %v68 = vld [vmem:[#allocation3 + $0x28] sm:$0xff]
    %v69 = vld [vmem:[#allocation3 + $0x30] sm:$0xff]
    %v70 = vld [vmem:[#allocation3 + $0x38] sm:$0xff]
    %v71 = vld [vmem:[#allocation3 + $0x40] sm:$0xff]
    %v72 = vld [vmem:[#allocation3 + $0x48] sm:$0xff]
    %v73 = vld [vmem:[#allocation3 + $0x50] sm:$0xff]
    %v74 = vld [vmem:[#allocation3 + $0x58] sm:$0xff]
    %v75 = vld [vmem:[#allocation3 + $0x60] sm:$0xff]
    %v76 = vld [vmem:[#allocation3 + $0x68] sm:$0xff]
    %v77 = vld [vmem:[#allocation3 + $0x70] sm:$0xff]
    %v78 = vld [vmem:[#allocation3 + $0x78] sm:$0xff]
    %v79 = vld [vmem:[#allocation5] sm:$0x3]
    %v80 = vld [vmem:[#allocation5 + $0x2] sm:$0x3]
    %v81 = vld [vmem:[#allocation5 + $0x4] sm:$0x3]
    %v82 = vld [vmem:[#allocation5 + $0x6] sm:$0x3]
    %v83 = vld [vmem:[#allocation5 + $0x8] sm:$0x3]
    %v84 = vld [vmem:[#allocation5 + $0xa] sm:$0x3]
    %v85 = vld [vmem:[#allocation5 + $0xc] sm:$0x3]
    %v86 = vld [vmem:[#allocation5 + $0xe] sm:$0x3]
    %v87 = vld [vmem:[#allocation5 + $0x10] sm:$0x3]
    %v88 = vld [vmem:[#allocation5 + $0x12] sm:$0x3]
    %v89 = vld [vmem:[#allocation5 + $0x14] sm:$0x3]
    %v90 = vld [vmem:[#allocation5 + $0x16] sm:$0x3]
    %v91 = vld [vmem:[#allocation5 + $0x18] sm:$0x3]
    %v92 = vld [vmem:[#allocation5 + $0x1a] sm:$0x3]
    %v93 = vld [vmem:[#allocation5 + $0x1c] sm:$0x3]
    %v94 = vld [vmem:[#allocation5 + $0x1e] sm:$0x3]
    %v95 = vld [vmem:[%s2] sm:$0xf]
    %v112 = vcombine.high %v63, %v63
    %v113 = vcombine.high %v64, %v64
    %v114 = vcombine.high %v65, %v65
    %v115 = vcombine.high %v66, %v66
    %v116 = vcombine.high %v67, %v67
    %v117 = vcombine.high %v68, %v68
    %v118 = vcombine.high %v69, %v69
    %v119 = vcombine.high %v70, %v70
    %v120 = vcombine.high %v71, %v71
    %v121 = vcombine.high %v72, %v72
    %v122 = vcombine.high %v73, %v73
    %v123 = vcombine.high %v74, %v74
    %v124 = vcombine.high %v75, %v75
    %v125 = vcombine.high %v76, %v76
    %v126 = vcombine.high %v77, %v77
    %v127 = vcombine.high %v78, %v78
    %vm144 = vcmask 1043456
    %v145 = vsel %vm144, %v63, -inf
    %v146 = vrot.slane %v145, 4
    %v147 = vmax.f32 %v145, %v146
    %v148 = vrot.slane %v147, 2
    %v149 = vmax.f32 %v147, %v148
    %v150 = vrot.slane %v149, 1
    %v151 = vmax.f32 %v149, %v150
    %v152 = vsel %vm144, %v112, -inf
    %v153 = vrot.slane %v152, 4
    %v154 = vmax.f32 %v152, %v153
    %v155 = vrot.slane %v154, 2
    %v156 = vmax.f32 %v154, %v155
    %v157 = vrot.slane %v156, 1
    %v158 = vmax.f32 %v156, %v157
    %v159 = vsel %vm144, %v64, -inf
    %v160 = vrot.slane %v159, 4
    %v161 = vmax.f32 %v159, %v160
    %v162 = vrot.slane %v161, 2
    %v163 = vmax.f32 %v161, %v162
    %v164 = vrot.slane %v163, 1
    %v165 = vmax.f32 %v163, %v164
    %v166 = vsel %vm144, %v113, -inf
    %v167 = vrot.slane %v166, 4
    %v168 = vmax.f32 %v166, %v167
    %v169 = vrot.slane %v168, 2
    %v170 = vmax.f32 %v168, %v169
    %v171 = vrot.slane %v170, 1
    %v172 = vmax.f32 %v170, %v171
    %v173 = vsel %vm144, %v65, -inf
    %v174 = vrot.slane %v173, 4
    %v175 = vmax.f32 %v173, %v174
    %v176 = vrot.slane %v175, 2
    %v177 = vmax.f32 %v175, %v176
    %v178 = vrot.slane %v177, 1
    %v179 = vmax.f32 %v177, %v178
    %v180 = vsel %vm144, %v114, -inf
    %v181 = vrot.slane %v180, 4
    %v182 = vmax.f32 %v180, %v181
    %v183 = vrot.slane %v182, 2
    %v184 = vmax.f32 %v182, %v183
    %v185 = vrot.slane %v184, 1
    %v186 = vmax.f32 %v184, %v185
    %v187 = vsel %vm144, %v66, -inf
    %v188 = vrot.slane %v187, 4
    %v189 = vmax.f32 %v187, %v188
    %v190 = vrot.slane %v189, 2
    %v191 = vmax.f32 %v189, %v190
    %v192 = vrot.slane %v191, 1
    %v193 = vmax.f32 %v191, %v192
    %v194 = vsel %vm144, %v115, -inf
    %v195 = vrot.slane %v194, 4
    %v196 = vmax.f32 %v194, %v195
    %v197 = vrot.slane %v196, 2
    %v198 = vmax.f32 %v196, %v197
    %v199 = vrot.slane %v198, 1
    %v200 = vmax.f32 %v198, %v199
    %v201 = vsel %vm144, %v67, -inf
    %v202 = vrot.slane %v201, 4
    %v203 = vmax.f32 %v201, %v202
    %v204 = vrot.slane %v203, 2
    %v205 = vmax.f32 %v203, %v204
    %v206 = vrot.slane %v205, 1
    %v207 = vmax.f32 %v205, %v206
    %v208 = vsel %vm144, %v116, -inf
    %v209 = vrot.slane %v208, 4
    %v210 = vmax.f32 %v208, %v209
    %v211 = vrot.slane %v210, 2
    %v212 = vmax.f32 %v210, %v211
    %v213 = vrot.slane %v212, 1
    %v214 = vmax.f32 %v212, %v213
    %v215 = vsel %vm144, %v68, -inf
    %v216 = vrot.slane %v215, 4
    %v217 = vmax.f32 %v215, %v216
    %v218 = vrot.slane %v217, 2
    %v219 = vmax.f32 %v217, %v218
    %v220 = vrot.slane %v219, 1
    %v221 = vmax.f32 %v219, %v220
    %v222 = vsel %vm144, %v117, -inf
    %v223 = vrot.slane %v222, 4
    %v224 = vmax.f32 %v222, %v223
    %v225 = vrot.slane %v224, 2
    %v226 = vmax.f32 %v224, %v225
    %v227 = vrot.slane %v226, 1
    %v228 = vmax.f32 %v226, %v227
    %v229 = vsel %vm144, %v69, -inf
    %v230 = vrot.slane %v229, 4
    %v231 = vmax.f32 %v229, %v230
    %v232 = vrot.slane %v231, 2
    %v233 = vmax.f32 %v231, %v232
    %v234 = vrot.slane %v233, 1
    %v235 = vmax.f32 %v233, %v234
    %v236 = vsel %vm144, %v118, -inf
    %v237 = vrot.slane %v236, 4
    %v238 = vmax.f32 %v236, %v237
    %v239 = vrot.slane %v238, 2
    %v240 = vmax.f32 %v238, %v239
    %v241 = vrot.slane %v240, 1
    %v242 = vmax.f32 %v240, %v241
    %v243 = vsel %vm144, %v70, -inf
    %v244 = vrot.slane %v243, 4
    %v245 = vmax.f32 %v243, %v244
    %v246 = vrot.slane %v245, 2
    %v247 = vmax.f32 %v245, %v246
    %v248 = vrot.slane %v247, 1
    %v249 = vmax.f32 %v247, %v248
    %v250 = vsel %vm144, %v119, -inf
    %v251 = vrot.slane %v250, 4
    %v252 = vmax.f32 %v250, %v251
    %v253 = vrot.slane %v252, 2
    %v254 = vmax.f32 %v252, %v253
    %v255 = vrot.slane %v254, 1
    %v256 = vmax.f32 %v254, %v255
    %v257 = vsel %vm144, %v71, -inf
    %v258 = vrot.slane %v257, 4
    %v259 = vmax.f32 %v257, %v258
    %v260 = vrot.slane %v259, 2
    %v261 = vmax.f32 %v259, %v260
    %v262 = vrot.slane %v261, 1
    %v263 = vmax.f32 %v261, %v262
    %v264 = vsel %vm144, %v120, -inf
    %v265 = vrot.slane %v264, 4
    %v266 = vmax.f32 %v264, %v265
    %v267 = vrot.slane %v266, 2
    %v268 = vmax.f32 %v266, %v267
    %v269 = vrot.slane %v268, 1
    %v270 = vmax.f32 %v268, %v269
    %v271 = vsel %vm144, %v72, -inf
    %v272 = vrot.slane %v271, 4
    %v273 = vmax.f32 %v271, %v272
    %v274 = vrot.slane %v273, 2
    %v275 = vmax.f32 %v273, %v274
    %v276 = vrot.slane %v275, 1
    %v277 = vmax.f32 %v275, %v276
    %v278 = vsel %vm144, %v121, -inf
    %v279 = vrot.slane %v278, 4
    %v280 = vmax.f32 %v278, %v279
    %v281 = vrot.slane %v280, 2
    %v282 = vmax.f32 %v280, %v281
    %v283 = vrot.slane %v282, 1
    %v284 = vmax.f32 %v282, %v283
    %v285 = vsel %vm144, %v73, -inf
    %v286 = vrot.slane %v285, 4
    %v287 = vmax.f32 %v285, %v286
    %v288 = vrot.slane %v287, 2
    %v289 = vmax.f32 %v287, %v288
    %v290 = vrot.slane %v289, 1
    %v291 = vmax.f32 %v289, %v290
    %v292 = vsel %vm144, %v122, -inf
    %v293 = vrot.slane %v292, 4
    %v294 = vmax.f32 %v292, %v293
    %v295 = vrot.slane %v294, 2
    %v296 = vmax.f32 %v294, %v295
    %v297 = vrot.slane %v296, 1
    %v298 = vmax.f32 %v296, %v297
    %v299 = vsel %vm144, %v74, -inf
    %v300 = vrot.slane %v299, 4
    %v301 = vmax.f32 %v299, %v300
    %v302 = vrot.slane %v301, 2
    %v303 = vmax.f32 %v301, %v302
    %v304 = vrot.slane %v303, 1
    %v305 = vmax.f32 %v303, %v304
    %v306 = vsel %vm144, %v123, -inf
    %v307 = vrot.slane %v306, 4
    %v308 = vmax.f32 %v306, %v307
    %v309 = vrot.slane %v308, 2
    %v310 = vmax.f32 %v308, %v309
    %v311 = vrot.slane %v310, 1
    %v312 = vmax.f32 %v310, %v311
    %v313 = vsel %vm144, %v75, -inf
    %v314 = vrot.slane %v313, 4
    %v315 = vmax.f32 %v313, %v314
    %v316 = vrot.slane %v315, 2
    %v317 = vmax.f32 %v315, %v316
    %v318 = vrot.slane %v317, 1
    %v319 = vmax.f32 %v317, %v318
    %v320 = vsel %vm144, %v124, -inf
    %v321 = vrot.slane %v320, 4
    %v322 = vmax.f32 %v320, %v321
    %v323 = vrot.slane %v322, 2
    %v324 = vmax.f32 %v322, %v323
    %v325 = vrot.slane %v324, 1
    %v326 = vmax.f32 %v324, %v325
    %v327 = vsel %vm144, %v76, -inf
    %v328 = vrot.slane %v327, 4
    %v329 = vmax.f32 %v327, %v328
    %v330 = vrot.slane %v329, 2
    %v331 = vmax.f32 %v329, %v330
    %v332 = vrot.slane %v331, 1
    %v333 = vmax.f32 %v331, %v332
    %v334 = vsel %vm144, %v125, -inf
    %v335 = vrot.slane %v334, 4
    %v336 = vmax.f32 %v334, %v335
    %v337 = vrot.slane %v336, 2
    %v338 = vmax.f32 %v336, %v337
    %v339 = vrot.slane %v338, 1
    %v340 = vmax.f32 %v338, %v339
    %v341 = vsel %vm144, %v77, -inf
    %v342 = vrot.slane %v341, 4
    %v343 = vmax.f32 %v341, %v342
    %v344 = vrot.slane %v343, 2
    %v345 = vmax.f32 %v343, %v344
    %v346 = vrot.slane %v345, 1
    %v347 = vmax.f32 %v345, %v346
    %v348 = vsel %vm144, %v126, -inf
    %v349 = vrot.slane %v348, 4
    %v350 = vmax.f32 %v348, %v349
    %v351 = vrot.slane %v350, 2
    %v352 = vmax.f32 %v350, %v351
    %v353 = vrot.slane %v352, 1
    %v354 = vmax.f32 %v352, %v353
    %v355 = vsel %vm144, %v78, -inf
    %v356 = vrot.slane %v355, 4
    %v357 = vmax.f32 %v355, %v356
    %v358 = vrot.slane %v357, 2
    %v359 = vmax.f32 %v357, %v358
    %v360 = vrot.slane %v359, 1
    %v361 = vmax.f32 %v359, %v360
    %v362 = vsel %vm144, %v127, -inf
    %v363 = vrot.slane %v362, 4
    %v364 = vmax.f32 %v362, %v363
    %v365 = vrot.slane %v364, 2
    %v366 = vmax.f32 %v364, %v365
    %v367 = vrot.slane %v366, 1
    %v368 = vmax.f32 %v366, %v367
    %v401 = vcombine.low %v151, %v158
    %v402 = vcombine.low %v165, %v172
    %v403 = vcombine.low %v179, %v186
    %v404 = vcombine.low %v193, %v200
    %v405 = vcombine.low %v207, %v214
    %v406 = vcombine.low %v221, %v228
    %v407 = vcombine.low %v235, %v242
    %v408 = vcombine.low %v249, %v256
    %v409 = vcombine.low %v263, %v270
    %v410 = vcombine.low %v277, %v284
    %v411 = vcombine.low %v291, %v298
    %v412 = vcombine.low %v305, %v312
    %v413 = vcombine.low %v319, %v326
    %v414 = vcombine.low %v333, %v340
    %v415 = vcombine.low %v347, %v354
    %v416 = vcombine.low %v361, %v368
    %v433 = vsub.f32 %v63, %v401
    %v434 = vsub.f32 %v64, %v402
    %v435 = vsub.f32 %v65, %v403
    %v436 = vsub.f32 %v66, %v404
    %v437 = vsub.f32 %v67, %v405
    %v438 = vsub.f32 %v68, %v406
    %v439 = vsub.f32 %v69, %v407
    %v440 = vsub.f32 %v70, %v408
    %v441 = vsub.f32 %v71, %v409
    %v442 = vsub.f32 %v72, %v410
    %v443 = vsub.f32 %v73, %v411
    %v444 = vsub.f32 %v74, %v412
    %v445 = vsub.f32 %v75, %v413
    %v446 = vsub.f32 %v76, %v414
    %v447 = vsub.f32 %v77, %v415
    %v448 = vsub.f32 %v78, %v416
    %v449 = vmul.f32 %v433, 1.442695
    %v450 = vpow.pop %v449
    %v451 = vmul.f32 %v434, 1.442695
    %v452 = vpow.pop %v451
    %v453 = vmul.f32 %v435, 1.442695
    %v454 = vpow.pop %v453
    %v455 = vmul.f32 %v436, 1.442695
    %v456 = vpow.pop %v455
    %v457 = vmul.f32 %v437, 1.442695
    %v458 = vpow.pop %v457
    %v459 = vmul.f32 %v438, 1.442695
    %v460 = vpow.pop %v459
    %v461 = vmul.f32 %v439, 1.442695
    %v462 = vpow.pop %v461
    %v463 = vmul.f32 %v440, 1.442695
    %v464 = vpow.pop %v463
    %v465 = vmul.f32 %v441, 1.442695
    %v466 = vpow.pop %v465
    %v467 = vmul.f32 %v442, 1.442695
    %v468 = vpow.pop %v467
    %v469 = vmul.f32 %v443, 1.442695
    %v470 = vpow.pop %v469
    %v471 = vmul.f32 %v444, 1.442695
    %v472 = vpow.pop %v471
    %v473 = vmul.f32 %v445, 1.442695
    %v474 = vpow.pop %v473
    %v475 = vmul.f32 %v446, 1.442695
    %v476 = vpow.pop %v475
    %v477 = vmul.f32 %v447, 1.442695
    %v478 = vpow.pop %v477
    %v479 = vmul.f32 %v448, 1.442695
    %v480 = vpow.pop %v479
    %v497 = vcombine.high %v450, %v450
    %v498 = vcombine.high %v452, %v452
    %v499 = vcombine.high %v454, %v454
    %v500 = vcombine.high %v456, %v456
    %v501 = vcombine.high %v458, %v458
    %v502 = vcombine.high %v460, %v460
    %v503 = vcombine.high %v462, %v462
    %v504 = vcombine.high %v464, %v464
    %v505 = vcombine.high %v466, %v466
    %v506 = vcombine.high %v468, %v468
    %v507 = vcombine.high %v470, %v470
    %v508 = vcombine.high %v472, %v472
    %v509 = vcombine.high %v474, %v474
    %v510 = vcombine.high %v476, %v476
    %v511 = vcombine.high %v478, %v478
    %v512 = vcombine.high %v480, %v480
    %v529 = vsel %vm144, %v450, 0.0
    %v530 = vrot.slane %v529, 4
    %v531 = vadd.f32 %v529, %v530
    %v532 = vrot.slane %v531, 2
    %v533 = vadd.f32 %v531, %v532
    %v534 = vrot.slane %v533, 1
    %v535 = vadd.f32 %v533, %v534
    %v536 = vsel %vm144, %v497, 0.0
    %v537 = vrot.slane %v536, 4
    %v538 = vadd.f32 %v536, %v537
    %v539 = vrot.slane %v538, 2
    %v540 = vadd.f32 %v538, %v539
    %v541 = vrot.slane %v540, 1
    %v542 = vadd.f32 %v540, %v541
    %v543 = vsel %vm144, %v452, 0.0
    %v544 = vrot.slane %v543, 4
    %v545 = vadd.f32 %v543, %v544
    %v546 = vrot.slane %v545, 2
    %v547 = vadd.f32 %v545, %v546
    %v548 = vrot.slane %v547, 1
    %v549 = vadd.f32 %v547, %v548
    %v550 = vsel %vm144, %v498, 0.0
    %v551 = vrot.slane %v550, 4
    %v552 = vadd.f32 %v550, %v551
    %v553 = vrot.slane %v552, 2
    %v554 = vadd.f32 %v552, %v553
    %v555 = vrot.slane %v554, 1
    %v556 = vadd.f32 %v554, %v555
    %v557 = vsel %vm144, %v454, 0.0
    %v558 = vrot.slane %v557, 4
    %v559 = vadd.f32 %v557, %v558
    %v560 = vrot.slane %v559, 2
    %v561 = vadd.f32 %v559, %v560
    %v562 = vrot.slane %v561, 1
    %v563 = vadd.f32 %v561, %v562
    %v564 = vsel %vm144, %v499, 0.0
    %v565 = vrot.slane %v564, 4
    %v566 = vadd.f32 %v564, %v565
    %v567 = vrot.slane %v566, 2
    %v568 = vadd.f32 %v566, %v567
    %v569 = vrot.slane %v568, 1
    %v570 = vadd.f32 %v568, %v569
    %v571 = vsel %vm144, %v456, 0.0
    %v572 = vrot.slane %v571, 4
    %v573 = vadd.f32 %v571, %v572
    %v574 = vrot.slane %v573, 2
    %v575 = vadd.f32 %v573, %v574
    %v576 = vrot.slane %v575, 1
    %v577 = vadd.f32 %v575, %v576
    %v578 = vsel %vm144, %v500, 0.0
    %v579 = vrot.slane %v578, 4
    %v580 = vadd.f32 %v578, %v579
    %v581 = vrot.slane %v580, 2
    %v582 = vadd.f32 %v580, %v581
    %v583 = vrot.slane %v582, 1
    %v584 = vadd.f32 %v582, %v583
    %v585 = vsel %vm144, %v458, 0.0
    %v586 = vrot.slane %v585, 4
    %v587 = vadd.f32 %v585, %v586
    %v588 = vrot.slane %v587, 2
    %v589 = vadd.f32 %v587, %v588
    %v590 = vrot.slane %v589, 1
    %v591 = vadd.f32 %v589, %v590
    %v592 = vsel %vm144, %v501, 0.0
    %v593 = vrot.slane %v592, 4
    %v594 = vadd.f32 %v592, %v593
    %v595 = vrot.slane %v594, 2
    %v596 = vadd.f32 %v594, %v595
    %v597 = vrot.slane %v596, 1
    %v598 = vadd.f32 %v596, %v597
    %v599 = vsel %vm144, %v460, 0.0
    %v600 = vrot.slane %v599, 4
    %v601 = vadd.f32 %v599, %v600
    %v602 = vrot.slane %v601, 2
    %v603 = vadd.f32 %v601, %v602
    %v604 = vrot.slane %v603, 1
    %v605 = vadd.f32 %v603, %v604
    %v606 = vsel %vm144, %v502, 0.0
    %v607 = vrot.slane %v606, 4
    %v608 = vadd.f32 %v606, %v607
    %v609 = vrot.slane %v608, 2
    %v610 = vadd.f32 %v608, %v609
    %v611 = vrot.slane %v610, 1
    %v612 = vadd.f32 %v610, %v611
    %v613 = vsel %vm144, %v462, 0.0
    %v614 = vrot.slane %v613, 4
    %v615 = vadd.f32 %v613, %v614
    %v616 = vrot.slane %v615, 2
    %v617 = vadd.f32 %v615, %v616
    %v618 = vrot.slane %v617, 1
    %v619 = vadd.f32 %v617, %v618
    %v620 = vsel %vm144, %v503, 0.0
    %v621 = vrot.slane %v620, 4
    %v622 = vadd.f32 %v620, %v621
    %v623 = vrot.slane %v622, 2
    %v624 = vadd.f32 %v622, %v623
    %v625 = vrot.slane %v624, 1
    %v626 = vadd.f32 %v624, %v625
    %v627 = vsel %vm144, %v464, 0.0
    %v628 = vrot.slane %v627, 4
    %v629 = vadd.f32 %v627, %v628
    %v630 = vrot.slane %v629, 2
    %v631 = vadd.f32 %v629, %v630
    %v632 = vrot.slane %v631, 1
    %v633 = vadd.f32 %v631, %v632
    %v634 = vsel %vm144, %v504, 0.0
    %v635 = vrot.slane %v634, 4
    %v636 = vadd.f32 %v634, %v635
    %v637 = vrot.slane %v636, 2
    %v638 = vadd.f32 %v636, %v637
    %v639 = vrot.slane %v638, 1
    %v640 = vadd.f32 %v638, %v639
    %v641 = vsel %vm144, %v466, 0.0
    %v642 = vrot.slane %v641, 4
    %v643 = vadd.f32 %v641, %v642
    %v644 = vrot.slane %v643, 2
    %v645 = vadd.f32 %v643, %v644
    %v646 = vrot.slane %v645, 1
    %v647 = vadd.f32 %v645, %v646
    %v648 = vsel %vm144, %v505, 0.0
    %v649 = vrot.slane %v648, 4
    %v650 = vadd.f32 %v648, %v649
    %v651 = vrot.slane %v650, 2
    %v652 = vadd.f32 %v650, %v651
    %v653 = vrot.slane %v652, 1
    %v654 = vadd.f32 %v652, %v653
    %v655 = vsel %vm144, %v468, 0.0
    %v656 = vrot.slane %v655, 4
    %v657 = vadd.f32 %v655, %v656
    %v658 = vrot.slane %v657, 2
    %v659 = vadd.f32 %v657, %v658
    %v660 = vrot.slane %v659, 1
    %v661 = vadd.f32 %v659, %v660
    %v662 = vsel %vm144, %v506, 0.0
    %v663 = vrot.slane %v662, 4
    %v664 = vadd.f32 %v662, %v663
    %v665 = vrot.slane %v664, 2
    %v666 = vadd.f32 %v664, %v665
    %v667 = vrot.slane %v666, 1
    %v668 = vadd.f32 %v666, %v667
    %v669 = vsel %vm144, %v470, 0.0
    %v670 = vrot.slane %v669, 4
    %v671 = vadd.f32 %v669, %v670
    %v672 = vrot.slane %v671, 2
    %v673 = vadd.f32 %v671, %v672
    %v674 = vrot.slane %v673, 1
    %v675 = vadd.f32 %v673, %v674
    %v676 = vsel %vm144, %v507, 0.0
    %v677 = vrot.slane %v676, 4
    %v678 = vadd.f32 %v676, %v677
    %v679 = vrot.slane %v678, 2
    %v680 = vadd.f32 %v678, %v679
    %v681 = vrot.slane %v680, 1
    %v682 = vadd.f32 %v680, %v681
    %v683 = vsel %vm144, %v472, 0.0
    %v684 = vrot.slane %v683, 4
    %v685 = vadd.f32 %v683, %v684
    %v686 = vrot.slane %v685, 2
    %v687 = vadd.f32 %v685, %v686
    %v688 = vrot.slane %v687, 1
    %v689 = vadd.f32 %v687, %v688
    %v690 = vsel %vm144, %v508, 0.0
    %v691 = vrot.slane %v690, 4
    %v692 = vadd.f32 %v690, %v691
    %v693 = vrot.slane %v692, 2
    %v694 = vadd.f32 %v692, %v693
    %v695 = vrot.slane %v694, 1
    %v696 = vadd.f32 %v694, %v695
    %v697 = vsel %vm144, %v474, 0.0
    %v698 = vrot.slane %v697, 4
    %v699 = vadd.f32 %v697, %v698
    %v700 = vrot.slane %v699, 2
    %v701 = vadd.f32 %v699, %v700
    %v702 = vrot.slane %v701, 1
    %v703 = vadd.f32 %v701, %v702
    %v704 = vsel %vm144, %v509, 0.0
    %v705 = vrot.slane %v704, 4
    %v706 = vadd.f32 %v704, %v705
    %v707 = vrot.slane %v706, 2
    %v708 = vadd.f32 %v706, %v707
    %v709 = vrot.slane %v708, 1
    %v710 = vadd.f32 %v708, %v709
    %v711 = vsel %vm144, %v476, 0.0
    %v712 = vrot.slane %v711, 4
    %v713 = vadd.f32 %v711, %v712
    %v714 = vrot.slane %v713, 2
    %v715 = vadd.f32 %v713, %v714
    %v716 = vrot.slane %v715, 1
    %v717 = vadd.f32 %v715, %v716
    %v718 = vsel %vm144, %v510, 0.0
    %v719 = vrot.slane %v718, 4
    %v720 = vadd.f32 %v718, %v719
    %v721 = vrot.slane %v720, 2
    %v722 = vadd.f32 %v720, %v721
    %v723 = vrot.slane %v722, 1
    %v724 = vadd.f32 %v722, %v723
    %v725 = vsel %vm144, %v478, 0.0
    %v726 = vrot.slane %v725, 4
    %v727 = vadd.f32 %v725, %v726
    %v728 = vrot.slane %v727, 2
    %v729 = vadd.f32 %v727, %v728
    %v730 = vrot.slane %v729, 1
    %v731 = vadd.f32 %v729, %v730
    %v732 = vsel %vm144, %v511, 0.0
    %v733 = vrot.slane %v732, 4
    %v734 = vadd.f32 %v732, %v733
    %v735 = vrot.slane %v734, 2
    %v736 = vadd.f32 %v734, %v735
    %v737 = vrot.slane %v736, 1
    %v738 = vadd.f32 %v736, %v737
    %v739 = vsel %vm144, %v480, 0.0
    %v740 = vrot.slane %v739, 4
    %v741 = vadd.f32 %v739, %v740
    %v742 = vrot.slane %v741, 2
    %v743 = vadd.f32 %v741, %v742
    %v744 = vrot.slane %v743, 1
    %v745 = vadd.f32 %v743, %v744
    %v746 = vsel %vm144, %v512, 0.0
    %v747 = vrot.slane %v746, 4
    %v748 = vadd.f32 %v746, %v747
    %v749 = vrot.slane %v748, 2
    %v750 = vadd.f32 %v748, %v749
    %v751 = vrot.slane %v750, 1
    %v752 = vadd.f32 %v750, %v751
    %v753 = vlog2.pop %v535
    %v754 = vmul.f32 %v753, 0.6931472
    %v755 = vlog2.pop %v542
    %v756 = vmul.f32 %v755, 0.6931472
    %v757 = vlog2.pop %v549
    %v758 = vmul.f32 %v757, 0.6931472
    %v759 = vlog2.pop %v556
    %v760 = vmul.f32 %v759, 0.6931472
    %v761 = vlog2.pop %v563
    %v762 = vmul.f32 %v761, 0.6931472
    %v763 = vlog2.pop %v570
    %v764 = vmul.f32 %v763, 0.6931472
    %v765 = vlog2.pop %v577
    %v766 = vmul.f32 %v765, 0.6931472
    %v767 = vlog2.pop %v584
    %v768 = vmul.f32 %v767, 0.6931472
    %v769 = vlog2.pop %v591
    %v770 = vmul.f32 %v769, 0.6931472
    %v771 = vlog2.pop %v598
    %v772 = vmul.f32 %v771, 0.6931472
    %v773 = vlog2.pop %v605
    %v774 = vmul.f32 %v773, 0.6931472
    %v775 = vlog2.pop %v612
    %v776 = vmul.f32 %v775, 0.6931472
    %v777 = vlog2.pop %v619
    %v778 = vmul.f32 %v777, 0.6931472
    %v779 = vlog2.pop %v626
    %v780 = vmul.f32 %v779, 0.6931472
    %v781 = vlog2.pop %v633
    %v782 = vmul.f32 %v781, 0.6931472
    %v783 = vlog2.pop %v640
    %v784 = vmul.f32 %v783, 0.6931472
    %v785 = vlog2.pop %v647
    %v786 = vmul.f32 %v785, 0.6931472
    %v787 = vlog2.pop %v654
    %v788 = vmul.f32 %v787, 0.6931472
    %v789 = vlog2.pop %v661
    %v790 = vmul.f32 %v789, 0.6931472
    %v791 = vlog2.pop %v668
    %v792 = vmul.f32 %v791, 0.6931472
    %v793 = vlog2.pop %v675
    %v794 = vmul.f32 %v793, 0.6931472
    %v795 = vlog2.pop %v682
    %v796 = vmul.f32 %v795, 0.6931472
    %v797 = vlog2.pop %v689
    %v798 = vmul.f32 %v797, 0.6931472
    %v799 = vlog2.pop %v696
    %v800 = vmul.f32 %v799, 0.6931472
    %v801 = vlog2.pop %v703
    %v802 = vmul.f32 %v801, 0.6931472
    %v803 = vlog2.pop %v710
    %v804 = vmul.f32 %v803, 0.6931472
    %v805 = vlog2.pop %v717
    %v806 = vmul.f32 %v805, 0.6931472
    %v807 = vlog2.pop %v724
    %v808 = vmul.f32 %v807, 0.6931472
    %v809 = vlog2.pop %v731
    %v810 = vmul.f32 %v809, 0.6931472
    %v811 = vlog2.pop %v738
    %v812 = vmul.f32 %v811, 0.6931472
    %v813 = vlog2.pop %v745
    %v814 = vmul.f32 %v813, 0.6931472
    %v815 = vlog2.pop %v752
    %v816 = vmul.f32 %v815, 0.6931472
    %v817 = vlaneseq
    %v818 = vshrl.u32 %v817, 7
    %v819 = vlaneseq
    %v820 = vshrl.u32 %v819, 7
    %v821 = vsub.s32 0, %v820
    %v822 = vrot.slane %v79, %v821
    %v823 = vlaneseq
    %v824 = vshrl.u32 %v823, 7
    %v825 = vsub.s32 1, %v824
    %v826 = vrot.slane %v79, %v825
    %v827 = vlaneseq
    %v828 = vshrl.u32 %v827, 7
    %v829 = vsub.s32 0, %v828
    %v830 = vrot.slane %v80, %v829
    %v831 = vlaneseq
    %v832 = vshrl.u32 %v831, 7
    %v833 = vsub.s32 1, %v832
    %v834 = vrot.slane %v80, %v833
    %v835 = vlaneseq
    %v836 = vshrl.u32 %v835, 7
    %v837 = vsub.s32 0, %v836
    %v838 = vrot.slane %v81, %v837
    %v839 = vlaneseq
    %v840 = vshrl.u32 %v839, 7
    %v841 = vsub.s32 1, %v840
    %v842 = vrot.slane %v81, %v841
    %v843 = vlaneseq
    %v844 = vshrl.u32 %v843, 7
    %v845 = vsub.s32 0, %v844
    %v846 = vrot.slane %v82, %v845
    %v847 = vlaneseq
    %v848 = vshrl.u32 %v847, 7
    %v849 = vsub.s32 1, %v848
    %v850 = vrot.slane %v82, %v849
    %v851 = vlaneseq
    %v852 = vshrl.u32 %v851, 7
    %v853 = vsub.s32 0, %v852
    %v854 = vrot.slane %v83, %v853
    %v855 = vlaneseq
    %v856 = vshrl.u32 %v855, 7
    %v857 = vsub.s32 1, %v856
    %v858 = vrot.slane %v83, %v857
    %v859 = vlaneseq
    %v860 = vshrl.u32 %v859, 7
    %v861 = vsub.s32 0, %v860
    %v862 = vrot.slane %v84, %v861
    %v863 = vlaneseq
    %v864 = vshrl.u32 %v863, 7
    %v865 = vsub.s32 1, %v864
    %v866 = vrot.slane %v84, %v865
    %v867 = vlaneseq
    %v868 = vshrl.u32 %v867, 7
    %v869 = vsub.s32 0, %v868
    %v870 = vrot.slane %v85, %v869
    %v871 = vlaneseq
    %v872 = vshrl.u32 %v871, 7
    %v873 = vsub.s32 1, %v872
    %v874 = vrot.slane %v85, %v873
    %v875 = vlaneseq
    %v876 = vshrl.u32 %v875, 7
    %v877 = vsub.s32 0, %v876
    %v878 = vrot.slane %v86, %v877
    %v879 = vlaneseq
    %v880 = vshrl.u32 %v879, 7
    %v881 = vsub.s32 1, %v880
    %v882 = vrot.slane %v86, %v881
    %v883 = vlaneseq
    %v884 = vshrl.u32 %v883, 7
    %v885 = vsub.s32 0, %v884
    %v886 = vrot.slane %v87, %v885
    %v887 = vlaneseq
    %v888 = vshrl.u32 %v887, 7
    %v889 = vsub.s32 1, %v888
    %v890 = vrot.slane %v87, %v889
    %v891 = vlaneseq
    %v892 = vshrl.u32 %v891, 7
    %v893 = vsub.s32 0, %v892
    %v894 = vrot.slane %v88, %v893
    %v895 = vlaneseq
    %v896 = vshrl.u32 %v895, 7
    %v897 = vsub.s32 1, %v896
    %v898 = vrot.slane %v88, %v897
    %v899 = vlaneseq
    %v900 = vshrl.u32 %v899, 7
    %v901 = vsub.s32 0, %v900
    %v902 = vrot.slane %v89, %v901
    %v903 = vlaneseq
    %v904 = vshrl.u32 %v903, 7
    %v905 = vsub.s32 1, %v904
    %v906 = vrot.slane %v89, %v905
    %v907 = vlaneseq
    %v908 = vshrl.u32 %v907, 7
    %v909 = vsub.s32 0, %v908
    %v910 = vrot.slane %v90, %v909
    %v911 = vlaneseq
    %v912 = vshrl.u32 %v911, 7
    %v913 = vsub.s32 1, %v912
    %v914 = vrot.slane %v90, %v913
    %v915 = vlaneseq
    %v916 = vshrl.u32 %v915, 7
    %v917 = vsub.s32 0, %v916
    %v918 = vrot.slane %v91, %v917
    %v919 = vlaneseq
    %v920 = vshrl.u32 %v919, 7
    %v921 = vsub.s32 1, %v920
    %v922 = vrot.slane %v91, %v921
    %v923 = vlaneseq
    %v924 = vshrl.u32 %v923, 7
    %v925 = vsub.s32 0, %v924
    %v926 = vrot.slane %v92, %v925
    %v927 = vlaneseq
    %v928 = vshrl.u32 %v927, 7
    %v929 = vsub.s32 1, %v928
    %v930 = vrot.slane %v92, %v929
    %v931 = vlaneseq
    %v932 = vshrl.u32 %v931, 7
    %v933 = vsub.s32 0, %v932
    %v934 = vrot.slane %v93, %v933
    %v935 = vlaneseq
    %v936 = vshrl.u32 %v935, 7
    %v937 = vsub.s32 1, %v936
    %v938 = vrot.slane %v93, %v937
    %v939 = vlaneseq
    %v940 = vshrl.u32 %v939, 7
    %v941 = vsub.s32 0, %v940
    %v942 = vrot.slane %v94, %v941
    %v943 = vlaneseq
    %v944 = vshrl.u32 %v943, 7
    %v945 = vsub.s32 1, %v944
    %v946 = vrot.slane %v94, %v945
    %vm947 = vcmp.eq.s32.totalorder %v818, %v822
    %vm948 = vcmp.eq.s32.totalorder %v818, %v826
    %vm949 = vcmp.eq.s32.totalorder %v818, %v830
    %vm950 = vcmp.eq.s32.totalorder %v818, %v834
    %vm951 = vcmp.eq.s32.totalorder %v818, %v838
    %vm952 = vcmp.eq.s32.totalorder %v818, %v842
    %vm953 = vcmp.eq.s32.totalorder %v818, %v846
    %vm954 = vcmp.eq.s32.totalorder %v818, %v850
    %vm955 = vcmp.eq.s32.totalorder %v818, %v854
    %vm956 = vcmp.eq.s32.totalorder %v818, %v858
    %vm957 = vcmp.eq.s32.totalorder %v818, %v862
    %vm958 = vcmp.eq.s32.totalorder %v818, %v866
    %vm959 = vcmp.eq.s32.totalorder %v818, %v870
    %vm960 = vcmp.eq.s32.totalorder %v818, %v874
    %vm961 = vcmp.eq.s32.totalorder %v818, %v878
    %vm962 = vcmp.eq.s32.totalorder %v818, %v882
    %vm963 = vcmp.eq.s32.totalorder %v818, %v886
    %vm964 = vcmp.eq.s32.totalorder %v818, %v890
    %vm965 = vcmp.eq.s32.totalorder %v818, %v894
    %vm966 = vcmp.eq.s32.totalorder %v818, %v898
    %vm967 = vcmp.eq.s32.totalorder %v818, %v902
    %vm968 = vcmp.eq.s32.totalorder %v818, %v906
    %vm969 = vcmp.eq.s32.totalorder %v818, %v910
    %vm970 = vcmp.eq.s32.totalorder %v818, %v914
    %vm971 = vcmp.eq.s32.totalorder %v818, %v918
    %vm972 = vcmp.eq.s32.totalorder %v818, %v922
    %vm973 = vcmp.eq.s32.totalorder %v818, %v926
    %vm974 = vcmp.eq.s32.totalorder %v818, %v930
    %vm975 = vcmp.eq.s32.totalorder %v818, %v934
    %vm976 = vcmp.eq.s32.totalorder %v818, %v938
    %vm977 = vcmp.eq.s32.totalorder %v818, %v942
    %vm978 = vcmp.eq.s32.totalorder %v818, %v946
    %v979 = vsel %vm947, 1, 0
    %v980 = vsel %vm948, 1, 0
    %v981 = vsel %vm949, 1, 0
    %v982 = vsel %vm950, 1, 0
    %v983 = vsel %vm951, 1, 0
    %v984 = vsel %vm952, 1, 0
    %v985 = vsel %vm953, 1, 0
    %v986 = vsel %vm954, 1, 0
    %v987 = vsel %vm955, 1, 0
    %v988 = vsel %vm956, 1, 0
    %v989 = vsel %vm957, 1, 0
    %v990 = vsel %vm958, 1, 0
    %v991 = vsel %vm959, 1, 0
    %v992 = vsel %vm960, 1, 0
    %v993 = vsel %vm961, 1, 0
    %v994 = vsel %vm962, 1, 0
    %v995 = vsel %vm963, 1, 0
    %v996 = vsel %vm964, 1, 0
    %v997 = vsel %vm965, 1, 0
    %v998 = vsel %vm966, 1, 0
    %v999 = vsel %vm967, 1, 0
    %v1000 = vsel %vm968, 1, 0
    %v1001 = vsel %vm969, 1, 0
    %v1002 = vsel %vm970, 1, 0
    %v1003 = vsel %vm971, 1, 0
    %v1004 = vsel %vm972, 1, 0
    %v1005 = vsel %vm973, 1, 0
    %v1006 = vsel %vm974, 1, 0
    %v1007 = vsel %vm975, 1, 0
    %v1008 = vsel %vm976, 1, 0
    %v1009 = vsel %vm977, 1, 0
    %v1010 = vsel %vm978, 1, 0
    %v1011 = vcvt.s32.f32 %v979
    %v1012 = vcvt.s32.f32 %v980
    %v1013 = vcvt.s32.f32 %v981
    %v1014 = vcvt.s32.f32 %v982
    %v1015 = vcvt.s32.f32 %v983
    %v1016 = vcvt.s32.f32 %v984
    %v1017 = vcvt.s32.f32 %v985
    %v1018 = vcvt.s32.f32 %v986
    %v1019 = vcvt.s32.f32 %v987
    %v1020 = vcvt.s32.f32 %v988
    %v1021 = vcvt.s32.f32 %v989
    %v1022 = vcvt.s32.f32 %v990
    %v1023 = vcvt.s32.f32 %v991
    %v1024 = vcvt.s32.f32 %v992
    %v1025 = vcvt.s32.f32 %v993
    %v1026 = vcvt.s32.f32 %v994
    %v1027 = vcvt.s32.f32 %v995
    %v1028 = vcvt.s32.f32 %v996
    %v1029 = vcvt.s32.f32 %v997
    %v1030 = vcvt.s32.f32 %v998
    %v1031 = vcvt.s32.f32 %v999
    %v1032 = vcvt.s32.f32 %v1000
    %v1033 = vcvt.s32.f32 %v1001
    %v1034 = vcvt.s32.f32 %v1002
    %v1035 = vcvt.s32.f32 %v1003
    %v1036 = vcvt.s32.f32 %v1004
    %v1037 = vcvt.s32.f32 %v1005
    %v1038 = vcvt.s32.f32 %v1006
    %v1039 = vcvt.s32.f32 %v1007
    %v1040 = vcvt.s32.f32 %v1008
    %v1041 = vcvt.s32.f32 %v1009
    %v1042 = vcvt.s32.f32 %v1010
    %v1059 = vcombine.high %v433, %v433
    %v1060 = vcombine.high %v434, %v434
    %v1061 = vcombine.high %v435, %v435
    %v1062 = vcombine.high %v436, %v436
    %v1063 = vcombine.high %v437, %v437
    %v1064 = vcombine.high %v438, %v438
    %v1065 = vcombine.high %v439, %v439
    %v1066 = vcombine.high %v440, %v440
    %v1067 = vcombine.high %v441, %v441
    %v1068 = vcombine.high %v442, %v442
    %v1069 = vcombine.high %v443, %v443
    %v1070 = vcombine.high %v444, %v444
    %v1071 = vcombine.high %v445, %v445
    %v1072 = vcombine.high %v446, %v446
    %v1073 = vcombine.high %v447, %v447
    %v1074 = vcombine.high %v448, %v448
    %v1091 = vmul.f32 %v1011, %v433
    %v1092 = vmul.f32 %v1012, %v1059
    %v1093 = vmul.f32 %v1013, %v434
    %v1094 = vmul.f32 %v1014, %v1060
    %v1095 = vmul.f32 %v1015, %v435
    %v1096 = vmul.f32 %v1016, %v1061
    %v1097 = vmul.f32 %v1017, %v436
    %v1098 = vmul.f32 %v1018, %v1062
    %v1099 = vmul.f32 %v1019, %v437
    %v1100 = vmul.f32 %v1020, %v1063
    %v1101 = vmul.f32 %v1021, %v438
    %v1102 = vmul.f32 %v1022, %v1064
    %v1103 = vmul.f32 %v1023, %v439
    %v1104 = vmul.f32 %v1024, %v1065
    %v1105 = vmul.f32 %v1025, %v440
    %v1106 = vmul.f32 %v1026, %v1066
    %v1107 = vmul.f32 %v1027, %v441
    %v1108 = vmul.f32 %v1028, %v1067
    %v1109 = vmul.f32 %v1029, %v442
    %v1110 = vmul.f32 %v1030, %v1068
    %v1111 = vmul.f32 %v1031, %v443
    %v1112 = vmul.f32 %v1032, %v1069
    %v1113 = vmul.f32 %v1033, %v444
    %v1114 = vmul.f32 %v1034, %v1070
    %v1115 = vmul.f32 %v1035, %v445
    %v1116 = vmul.f32 %v1036, %v1071
    %v1117 = vmul.f32 %v1037, %v446
    %v1118 = vmul.f32 %v1038, %v1072
    %v1119 = vmul.f32 %v1039, %v447
    %v1120 = vmul.f32 %v1040, %v1073
    %v1121 = vmul.f32 %v1041, %v448
    %v1122 = vmul.f32 %v1042, %v1074
    %v1123 = vsel %vm144, %v1091, 0.0
    %v1124 = vrot.slane %v1123, 4
    %v1125 = vadd.f32 %v1123, %v1124
    %v1126 = vrot.slane %v1125, 2
    %v1127 = vadd.f32 %v1125, %v1126
    %v1128 = vrot.slane %v1127, 1
    %v1129 = vadd.f32 %v1127, %v1128
    %v1130 = vsel %vm144, %v1092, 0.0
    %v1131 = vrot.slane %v1130, 4
    %v1132 = vadd.f32 %v1130, %v1131
    %v1133 = vrot.slane %v1132, 2
    %v1134 = vadd.f32 %v1132, %v1133
    %v1135 = vrot.slane %v1134, 1
    %v1136 = vadd.f32 %v1134, %v1135
    %v1137 = vsel %vm144, %v1093, 0.0
    %v1138 = vrot.slane %v1137, 4
    %v1139 = vadd.f32 %v1137, %v1138
    %v1140 = vrot.slane %v1139, 2
    %v1141 = vadd.f32 %v1139, %v1140
    %v1142 = vrot.slane %v1141, 1
    %v1143 = vadd.f32 %v1141, %v1142
    %v1144 = vsel %vm144, %v1094, 0.0
    %v1145 = vrot.slane %v1144, 4
    %v1146 = vadd.f32 %v1144, %v1145
    %v1147 = vrot.slane %v1146, 2
    %v1148 = vadd.f32 %v1146, %v1147
    %v1149 = vrot.slane %v1148, 1
    %v1150 = vadd.f32 %v1148, %v1149
    %v1151 = vsel %vm144, %v1095, 0.0
    %v1152 = vrot.slane %v1151, 4
    %v1153 = vadd.f32 %v1151, %v1152
    %v1154 = vrot.slane %v1153, 2
    %v1155 = vadd.f32 %v1153, %v1154
    %v1156 = vrot.slane %v1155, 1
    %v1157 = vadd.f32 %v1155, %v1156
    %v1158 = vsel %vm144, %v1096, 0.0
    %v1159 = vrot.slane %v1158, 4
    %v1160 = vadd.f32 %v1158, %v1159
    %v1161 = vrot.slane %v1160, 2
    %v1162 = vadd.f32 %v1160, %v1161
    %v1163 = vrot.slane %v1162, 1
    %v1164 = vadd.f32 %v1162, %v1163
    %v1165 = vsel %vm144, %v1097, 0.0
    %v1166 = vrot.slane %v1165, 4
    %v1167 = vadd.f32 %v1165, %v1166
    %v1168 = vrot.slane %v1167, 2
    %v1169 = vadd.f32 %v1167, %v1168
    %v1170 = vrot.slane %v1169, 1
    %v1171 = vadd.f32 %v1169, %v1170
    %v1172 = vsel %vm144, %v1098, 0.0
    %v1173 = vrot.slane %v1172, 4
    %v1174 = vadd.f32 %v1172, %v1173
    %v1175 = vrot.slane %v1174, 2
    %v1176 = vadd.f32 %v1174, %v1175
    %v1177 = vrot.slane %v1176, 1
    %v1178 = vadd.f32 %v1176, %v1177
    %v1179 = vsel %vm144, %v1099, 0.0
    %v1180 = vrot.slane %v1179, 4
    %v1181 = vadd.f32 %v1179, %v1180
    %v1182 = vrot.slane %v1181, 2
    %v1183 = vadd.f32 %v1181, %v1182
    %v1184 = vrot.slane %v1183, 1
    %v1185 = vadd.f32 %v1183, %v1184
    %v1186 = vsel %vm144, %v1100, 0.0
    %v1187 = vrot.slane %v1186, 4
    %v1188 = vadd.f32 %v1186, %v1187
    %v1189 = vrot.slane %v1188, 2
    %v1190 = vadd.f32 %v1188, %v1189
    %v1191 = vrot.slane %v1190, 1
    %v1192 = vadd.f32 %v1190, %v1191
    %v1193 = vsel %vm144, %v1101, 0.0
    %v1194 = vrot.slane %v1193, 4
    %v1195 = vadd.f32 %v1193, %v1194
    %v1196 = vrot.slane %v1195, 2
    %v1197 = vadd.f32 %v1195, %v1196
    %v1198 = vrot.slane %v1197, 1
    %v1199 = vadd.f32 %v1197, %v1198
    %v1200 = vsel %vm144, %v1102, 0.0
    %v1201 = vrot.slane %v1200, 4
    %v1202 = vadd.f32 %v1200, %v1201
    %v1203 = vrot.slane %v1202, 2
    %v1204 = vadd.f32 %v1202, %v1203
    %v1205 = vrot.slane %v1204, 1
    %v1206 = vadd.f32 %v1204, %v1205
    %v1207 = vsel %vm144, %v1103, 0.0
    %v1208 = vrot.slane %v1207, 4
    %v1209 = vadd.f32 %v1207, %v1208
    %v1210 = vrot.slane %v1209, 2
    %v1211 = vadd.f32 %v1209, %v1210
    %v1212 = vrot.slane %v1211, 1
    %v1213 = vadd.f32 %v1211, %v1212
    %v1214 = vsel %vm144, %v1104, 0.0
    %v1215 = vrot.slane %v1214, 4
    %v1216 = vadd.f32 %v1214, %v1215
    %v1217 = vrot.slane %v1216, 2
    %v1218 = vadd.f32 %v1216, %v1217
    %v1219 = vrot.slane %v1218, 1
    %v1220 = vadd.f32 %v1218, %v1219
    %v1221 = vsel %vm144, %v1105, 0.0
    %v1222 = vrot.slane %v1221, 4
    %v1223 = vadd.f32 %v1221, %v1222
    %v1224 = vrot.slane %v1223, 2
    %v1225 = vadd.f32 %v1223, %v1224
    %v1226 = vrot.slane %v1225, 1
    %v1227 = vadd.f32 %v1225, %v1226
    %v1228 = vsel %vm144, %v1106, 0.0
    %v1229 = vrot.slane %v1228, 4
    %v1230 = vadd.f32 %v1228, %v1229
    %v1231 = vrot.slane %v1230, 2
    %v1232 = vadd.f32 %v1230, %v1231
    %v1233 = vrot.slane %v1232, 1
    %v1234 = vadd.f32 %v1232, %v1233
    %v1235 = vsel %vm144, %v1107, 0.0
    %v1236 = vrot.slane %v1235, 4
    %v1237 = vadd.f32 %v1235, %v1236
    %v1238 = vrot.slane %v1237, 2
    %v1239 = vadd.f32 %v1237, %v1238
    %v1240 = vrot.slane %v1239, 1
    %v1241 = vadd.f32 %v1239, %v1240
    %v1242 = vsel %vm144, %v1108, 0.0
    %v1243 = vrot.slane %v1242, 4
    %v1244 = vadd.f32 %v1242, %v1243
    %v1245 = vrot.slane %v1244, 2
    %v1246 = vadd.f32 %v1244, %v1245
    %v1247 = vrot.slane %v1246, 1
    %v1248 = vadd.f32 %v1246, %v1247
    %v1249 = vsel %vm144, %v1109, 0.0
    %v1250 = vrot.slane %v1249, 4
    %v1251 = vadd.f32 %v1249, %v1250
    %v1252 = vrot.slane %v1251, 2
    %v1253 = vadd.f32 %v1251, %v1252
    %v1254 = vrot.slane %v1253, 1
    %v1255 = vadd.f32 %v1253, %v1254
    %v1256 = vsel %vm144, %v1110, 0.0
    %v1257 = vrot.slane %v1256, 4
    %v1258 = vadd.f32 %v1256, %v1257
    %v1259 = vrot.slane %v1258, 2
    %v1260 = vadd.f32 %v1258, %v1259
    %v1261 = vrot.slane %v1260, 1
    %v1262 = vadd.f32 %v1260, %v1261
    %v1263 = vsel %vm144, %v1111, 0.0
    %v1264 = vrot.slane %v1263, 4
    %v1265 = vadd.f32 %v1263, %v1264
    %v1266 = vrot.slane %v1265, 2
    %v1267 = vadd.f32 %v1265, %v1266
    %v1268 = vrot.slane %v1267, 1
    %v1269 = vadd.f32 %v1267, %v1268
    %v1270 = vsel %vm144, %v1112, 0.0
    %v1271 = vrot.slane %v1270, 4
    %v1272 = vadd.f32 %v1270, %v1271
    %v1273 = vrot.slane %v1272, 2
    %v1274 = vadd.f32 %v1272, %v1273
    %v1275 = vrot.slane %v1274, 1
    %v1276 = vadd.f32 %v1274, %v1275
    %v1277 = vsel %vm144, %v1113, 0.0
    %v1278 = vrot.slane %v1277, 4
    %v1279 = vadd.f32 %v1277, %v1278
    %v1280 = vrot.slane %v1279, 2
    %v1281 = vadd.f32 %v1279, %v1280
    %v1282 = vrot.slane %v1281, 1
    %v1283 = vadd.f32 %v1281, %v1282
    %v1284 = vsel %vm144, %v1114, 0.0
    %v1285 = vrot.slane %v1284, 4
    %v1286 = vadd.f32 %v1284, %v1285
    %v1287 = vrot.slane %v1286, 2
    %v1288 = vadd.f32 %v1286, %v1287
    %v1289 = vrot.slane %v1288, 1
    %v1290 = vadd.f32 %v1288, %v1289
    %v1291 = vsel %vm144, %v1115, 0.0
    %v1292 = vrot.slane %v1291, 4
    %v1293 = vadd.f32 %v1291, %v1292
    %v1294 = vrot.slane %v1293, 2
    %v1295 = vadd.f32 %v1293, %v1294
    %v1296 = vrot.slane %v1295, 1
    %v1297 = vadd.f32 %v1295, %v1296
    %v1298 = vsel %vm144, %v1116, 0.0
    %v1299 = vrot.slane %v1298, 4
    %v1300 = vadd.f32 %v1298, %v1299
    %v1301 = vrot.slane %v1300, 2
    %v1302 = vadd.f32 %v1300, %v1301
    %v1303 = vrot.slane %v1302, 1
    %v1304 = vadd.f32 %v1302, %v1303
    %v1305 = vsel %vm144, %v1117, 0.0
    %v1306 = vrot.slane %v1305, 4
    %v1307 = vadd.f32 %v1305, %v1306
    %v1308 = vrot.slane %v1307, 2
    %v1309 = vadd.f32 %v1307, %v1308
    %v1310 = vrot.slane %v1309, 1
    %v1311 = vadd.f32 %v1309, %v1310
    %v1312 = vsel %vm144, %v1118, 0.0
    %v1313 = vrot.slane %v1312, 4
    %v1314 = vadd.f32 %v1312, %v1313
    %v1315 = vrot.slane %v1314, 2
    %v1316 = vadd.f32 %v1314, %v1315
    %v1317 = vrot.slane %v1316, 1
    %v1318 = vadd.f32 %v1316, %v1317
    %v1319 = vsel %vm144, %v1119, 0.0
    %v1320 = vrot.slane %v1319, 4
    %v1321 = vadd.f32 %v1319, %v1320
    %v1322 = vrot.slane %v1321, 2
    %v1323 = vadd.f32 %v1321, %v1322
    %v1324 = vrot.slane %v1323, 1
    %v1325 = vadd.f32 %v1323, %v1324
    %v1326 = vsel %vm144, %v1120, 0.0
    %v1327 = vrot.slane %v1326, 4
    %v1328 = vadd.f32 %v1326, %v1327
    %v1329 = vrot.slane %v1328, 2
    %v1330 = vadd.f32 %v1328, %v1329
    %v1331 = vrot.slane %v1330, 1
    %v1332 = vadd.f32 %v1330, %v1331
    %v1333 = vsel %vm144, %v1121, 0.0
    %v1334 = vrot.slane %v1333, 4
    %v1335 = vadd.f32 %v1333, %v1334
    %v1336 = vrot.slane %v1335, 2
    %v1337 = vadd.f32 %v1335, %v1336
    %v1338 = vrot.slane %v1337, 1
    %v1339 = vadd.f32 %v1337, %v1338
    %v1340 = vsel %vm144, %v1122, 0.0
    %v1341 = vrot.slane %v1340, 4
    %v1342 = vadd.f32 %v1340, %v1341
    %v1343 = vrot.slane %v1342, 2
    %v1344 = vadd.f32 %v1342, %v1343
    %v1345 = vrot.slane %v1344, 1
    %v1346 = vadd.f32 %v1344, %v1345
    %1348 = vset.pattern.permute.xlu0 0
    %1349 = vperm.xlu0 %1348, %v95
    %v1350 = vpop.permute.xlu0 %1349
    %v1352 = vmul.f32 %v1011, %v1350
    %v1353 = vmul.f32 %v1012, %v1350
    %v1354 = vmul.f32 %v1013, %v1350
    %v1355 = vmul.f32 %v1014, %v1350
    %v1356 = vmul.f32 %v1015, %v1350
    %v1357 = vmul.f32 %v1016, %v1350
    %v1358 = vmul.f32 %v1017, %v1350
    %v1359 = vmul.f32 %v1018, %v1350
    %v1360 = vmul.f32 %v1019, %v1350
    %v1361 = vmul.f32 %v1020, %v1350
    %v1362 = vmul.f32 %v1021, %v1350
    %v1363 = vmul.f32 %v1022, %v1350
    %v1364 = vmul.f32 %v1023, %v1350
    %v1365 = vmul.f32 %v1024, %v1350
    %v1366 = vmul.f32 %v1025, %v1350
    %v1367 = vmul.f32 %v1026, %v1350
    %v1368 = vmul.f32 %v1027, %v1350
    %v1369 = vmul.f32 %v1028, %v1350
    %v1370 = vmul.f32 %v1029, %v1350
    %v1371 = vmul.f32 %v1030, %v1350
    %v1372 = vmul.f32 %v1031, %v1350
    %v1373 = vmul.f32 %v1032, %v1350
    %v1374 = vmul.f32 %v1033, %v1350
    %v1375 = vmul.f32 %v1034, %v1350
    %v1376 = vmul.f32 %v1035, %v1350
    %v1377 = vmul.f32 %v1036, %v1350
    %v1378 = vmul.f32 %v1037, %v1350
    %v1379 = vmul.f32 %v1038, %v1350
    %v1380 = vmul.f32 %v1039, %v1350
    %v1381 = vmul.f32 %v1040, %v1350
    %v1382 = vmul.f32 %v1041, %v1350
    %v1383 = vmul.f32 %v1042, %v1350
    %v1384 = vsel %vm144, %v1352, 0.0
    %v1385 = vrot.slane %v1384, 4
    %v1386 = vadd.f32 %v1384, %v1385
    %v1387 = vrot.slane %v1386, 2
    %v1388 = vadd.f32 %v1386, %v1387
    %v1389 = vrot.slane %v1388, 1
    %v1390 = vadd.f32 %v1388, %v1389
    %v1391 = vsel %vm144, %v1353, 0.0
    %v1392 = vrot.slane %v1391, 4
    %v1393 = vadd.f32 %v1391, %v1392
    %v1394 = vrot.slane %v1393, 2
    %v1395 = vadd.f32 %v1393, %v1394
    %v1396 = vrot.slane %v1395, 1
    %v1397 = vadd.f32 %v1395, %v1396
    %v1398 = vsel %vm144, %v1354, 0.0
    %v1399 = vrot.slane %v1398, 4
    %v1400 = vadd.f32 %v1398, %v1399
    %v1401 = vrot.slane %v1400, 2
    %v1402 = vadd.f32 %v1400, %v1401
    %v1403 = vrot.slane %v1402, 1
    %v1404 = vadd.f32 %v1402, %v1403
    %v1405 = vsel %vm144, %v1355, 0.0
    %v1406 = vrot.slane %v1405, 4
    %v1407 = vadd.f32 %v1405, %v1406
    %v1408 = vrot.slane %v1407, 2
    %v1409 = vadd.f32 %v1407, %v1408
    %v1410 = vrot.slane %v1409, 1
    %v1411 = vadd.f32 %v1409, %v1410
    %v1412 = vsel %vm144, %v1356, 0.0
    %v1413 = vrot.slane %v1412, 4
    %v1414 = vadd.f32 %v1412, %v1413
    %v1415 = vrot.slane %v1414, 2
    %v1416 = vadd.f32 %v1414, %v1415
    %v1417 = vrot.slane %v1416, 1
    %v1418 = vadd.f32 %v1416, %v1417
    %v1419 = vsel %vm144, %v1357, 0.0
    %v1420 = vrot.slane %v1419, 4
    %v1421 = vadd.f32 %v1419, %v1420
    %v1422 = vrot.slane %v1421, 2
    %v1423 = vadd.f32 %v1421, %v1422
    %v1424 = vrot.slane %v1423, 1
    %v1425 = vadd.f32 %v1423, %v1424
    %v1426 = vsel %vm144, %v1358, 0.0
    %v1427 = vrot.slane %v1426, 4
    %v1428 = vadd.f32 %v1426, %v1427
    %v1429 = vrot.slane %v1428, 2
    %v1430 = vadd.f32 %v1428, %v1429
    %v1431 = vrot.slane %v1430, 1
    %v1432 = vadd.f32 %v1430, %v1431
    %v1433 = vsel %vm144, %v1359, 0.0
    %v1434 = vrot.slane %v1433, 4
    %v1435 = vadd.f32 %v1433, %v1434
    %v1436 = vrot.slane %v1435, 2
    %v1437 = vadd.f32 %v1435, %v1436
    %v1438 = vrot.slane %v1437, 1
    %v1439 = vadd.f32 %v1437, %v1438
    %v1440 = vsel %vm144, %v1360, 0.0
    %v1441 = vrot.slane %v1440, 4
    %v1442 = vadd.f32 %v1440, %v1441
    %v1443 = vrot.slane %v1442, 2
    %v1444 = vadd.f32 %v1442, %v1443
    %v1445 = vrot.slane %v1444, 1
    %v1446 = vadd.f32 %v1444, %v1445
    %v1447 = vsel %vm144, %v1361, 0.0
    %v1448 = vrot.slane %v1447, 4
    %v1449 = vadd.f32 %v1447, %v1448
    %v1450 = vrot.slane %v1449, 2
    %v1451 = vadd.f32 %v1449, %v1450
    %v1452 = vrot.slane %v1451, 1
    %v1453 = vadd.f32 %v1451, %v1452
    %v1454 = vsel %vm144, %v1362, 0.0
    %v1455 = vrot.slane %v1454, 4
    %v1456 = vadd.f32 %v1454, %v1455
    %v1457 = vrot.slane %v1456, 2
    %v1458 = vadd.f32 %v1456, %v1457
    %v1459 = vrot.slane %v1458, 1
    %v1460 = vadd.f32 %v1458, %v1459
    %v1461 = vsel %vm144, %v1363, 0.0
    %v1462 = vrot.slane %v1461, 4
    %v1463 = vadd.f32 %v1461, %v1462
    %v1464 = vrot.slane %v1463, 2
    %v1465 = vadd.f32 %v1463, %v1464
    %v1466 = vrot.slane %v1465, 1
    %v1467 = vadd.f32 %v1465, %v1466
    %v1468 = vsel %vm144, %v1364, 0.0
    %v1469 = vrot.slane %v1468, 4
    %v1470 = vadd.f32 %v1468, %v1469
    %v1471 = vrot.slane %v1470, 2
    %v1472 = vadd.f32 %v1470, %v1471
    %v1473 = vrot.slane %v1472, 1
    %v1474 = vadd.f32 %v1472, %v1473
    %v1475 = vsel %vm144, %v1365, 0.0
    %v1476 = vrot.slane %v1475, 4
    %v1477 = vadd.f32 %v1475, %v1476
    %v1478 = vrot.slane %v1477, 2
    %v1479 = vadd.f32 %v1477, %v1478
    %v1480 = vrot.slane %v1479, 1
    %v1481 = vadd.f32 %v1479, %v1480
    %v1482 = vsel %vm144, %v1366, 0.0
    %v1483 = vrot.slane %v1482, 4
    %v1484 = vadd.f32 %v1482, %v1483
    %v1485 = vrot.slane %v1484, 2
    %v1486 = vadd.f32 %v1484, %v1485
    %v1487 = vrot.slane %v1486, 1
    %v1488 = vadd.f32 %v1486, %v1487
    %v1489 = vsel %vm144, %v1367, 0.0
    %v1490 = vrot.slane %v1489, 4
    %v1491 = vadd.f32 %v1489, %v1490
    %v1492 = vrot.slane %v1491, 2
    %v1493 = vadd.f32 %v1491, %v1492
    %v1494 = vrot.slane %v1493, 1
    %v1495 = vadd.f32 %v1493, %v1494
    %v1496 = vsel %vm144, %v1368, 0.0
    %v1497 = vrot.slane %v1496, 4
    %v1498 = vadd.f32 %v1496, %v1497
    %v1499 = vrot.slane %v1498, 2
    %v1500 = vadd.f32 %v1498, %v1499
    %v1501 = vrot.slane %v1500, 1
    %v1502 = vadd.f32 %v1500, %v1501
    %v1503 = vsel %vm144, %v1369, 0.0
    %v1504 = vrot.slane %v1503, 4
    %v1505 = vadd.f32 %v1503, %v1504
    %v1506 = vrot.slane %v1505, 2
    %v1507 = vadd.f32 %v1505, %v1506
    %v1508 = vrot.slane %v1507, 1
    %v1509 = vadd.f32 %v1507, %v1508
    %v1510 = vsel %vm144, %v1370, 0.0
    %v1511 = vrot.slane %v1510, 4
    %v1512 = vadd.f32 %v1510, %v1511
    %v1513 = vrot.slane %v1512, 2
    %v1514 = vadd.f32 %v1512, %v1513
    %v1515 = vrot.slane %v1514, 1
    %v1516 = vadd.f32 %v1514, %v1515
    %v1517 = vsel %vm144, %v1371, 0.0
    %v1518 = vrot.slane %v1517, 4
    %v1519 = vadd.f32 %v1517, %v1518
    %v1520 = vrot.slane %v1519, 2
    %v1521 = vadd.f32 %v1519, %v1520
    %v1522 = vrot.slane %v1521, 1
    %v1523 = vadd.f32 %v1521, %v1522
    %v1524 = vsel %vm144, %v1372, 0.0
    %v1525 = vrot.slane %v1524, 4
    %v1526 = vadd.f32 %v1524, %v1525
    %v1527 = vrot.slane %v1526, 2
    %v1528 = vadd.f32 %v1526, %v1527
    %v1529 = vrot.slane %v1528, 1
    %v1530 = vadd.f32 %v1528, %v1529
    %v1531 = vsel %vm144, %v1373, 0.0
    %v1532 = vrot.slane %v1531, 4
    %v1533 = vadd.f32 %v1531, %v1532
    %v1534 = vrot.slane %v1533, 2
    %v1535 = vadd.f32 %v1533, %v1534
    %v1536 = vrot.slane %v1535, 1
    %v1537 = vadd.f32 %v1535, %v1536
    %v1538 = vsel %vm144, %v1374, 0.0
    %v1539 = vrot.slane %v1538, 4
    %v1540 = vadd.f32 %v1538, %v1539
    %v1541 = vrot.slane %v1540, 2
    %v1542 = vadd.f32 %v1540, %v1541
    %v1543 = vrot.slane %v1542, 1
    %v1544 = vadd.f32 %v1542, %v1543
    %v1545 = vsel %vm144, %v1375, 0.0
    %v1546 = vrot.slane %v1545, 4
    %v1547 = vadd.f32 %v1545, %v1546
    %v1548 = vrot.slane %v1547, 2
    %v1549 = vadd.f32 %v1547, %v1548
    %v1550 = vrot.slane %v1549, 1
    %v1551 = vadd.f32 %v1549, %v1550
    %v1552 = vsel %vm144, %v1376, 0.0
    %v1553 = vrot.slane %v1552, 4
    %v1554 = vadd.f32 %v1552, %v1553
    %v1555 = vrot.slane %v1554, 2
    %v1556 = vadd.f32 %v1554, %v1555
    %v1557 = vrot.slane %v1556, 1
    %v1558 = vadd.f32 %v1556, %v1557
    %v1559 = vsel %vm144, %v1377, 0.0
    %v1560 = vrot.slane %v1559, 4
    %v1561 = vadd.f32 %v1559, %v1560
    %v1562 = vrot.slane %v1561, 2
    %v1563 = vadd.f32 %v1561, %v1562
    %v1564 = vrot.slane %v1563, 1
    %v1565 = vadd.f32 %v1563, %v1564
    %v1566 = vsel %vm144, %v1378, 0.0
    %v1567 = vrot.slane %v1566, 4
    %v1568 = vadd.f32 %v1566, %v1567
    %v1569 = vrot.slane %v1568, 2
    %v1570 = vadd.f32 %v1568, %v1569
    %v1571 = vrot.slane %v1570, 1
    %v1572 = vadd.f32 %v1570, %v1571
    %v1573 = vsel %vm144, %v1379, 0.0
    %v1574 = vrot.slane %v1573, 4
    %v1575 = vadd.f32 %v1573, %v1574
    %v1576 = vrot.slane %v1575, 2
    %v1577 = vadd.f32 %v1575, %v1576
    %v1578 = vrot.slane %v1577, 1
    %v1579 = vadd.f32 %v1577, %v1578
    %v1580 = vsel %vm144, %v1380, 0.0
    %v1581 = vrot.slane %v1580, 4
    %v1582 = vadd.f32 %v1580, %v1581
    %v1583 = vrot.slane %v1582, 2
    %v1584 = vadd.f32 %v1582, %v1583
    %v1585 = vrot.slane %v1584, 1
    %v1586 = vadd.f32 %v1584, %v1585
    %v1587 = vsel %vm144, %v1381, 0.0
    %v1588 = vrot.slane %v1587, 4
    %v1589 = vadd.f32 %v1587, %v1588
    %v1590 = vrot.slane %v1589, 2
    %v1591 = vadd.f32 %v1589, %v1590
    %v1592 = vrot.slane %v1591, 1
    %v1593 = vadd.f32 %v1591, %v1592
    %v1594 = vsel %vm144, %v1382, 0.0
    %v1595 = vrot.slane %v1594, 4
    %v1596 = vadd.f32 %v1594, %v1595
    %v1597 = vrot.slane %v1596, 2
    %v1598 = vadd.f32 %v1596, %v1597
    %v1599 = vrot.slane %v1598, 1
    %v1600 = vadd.f32 %v1598, %v1599
    %v1601 = vsel %vm144, %v1383, 0.0
    %v1602 = vrot.slane %v1601, 4
    %v1603 = vadd.f32 %v1601, %v1602
    %v1604 = vrot.slane %v1603, 2
    %v1605 = vadd.f32 %v1603, %v1604
    %v1606 = vrot.slane %v1605, 1
    %v1607 = vadd.f32 %v1605, %v1606
    %vm1608 = vcmp.ne.s32.totalorder %v79, 255
    %vm1609 = vcmp.ne.s32.totalorder %v80, 255
    %vm1610 = vcmp.ne.s32.totalorder %v81, 255
    %vm1611 = vcmp.ne.s32.totalorder %v82, 255
    %vm1612 = vcmp.ne.s32.totalorder %v83, 255
    %vm1613 = vcmp.ne.s32.totalorder %v84, 255
    %vm1614 = vcmp.ne.s32.totalorder %v85, 255
    %vm1615 = vcmp.ne.s32.totalorder %v86, 255
    %vm1616 = vcmp.ne.s32.totalorder %v87, 255
    %vm1617 = vcmp.ne.s32.totalorder %v88, 255
    %vm1618 = vcmp.ne.s32.totalorder %v89, 255
    %vm1619 = vcmp.ne.s32.totalorder %v90, 255
    %vm1620 = vcmp.ne.s32.totalorder %v91, 255
    %vm1621 = vcmp.ne.s32.totalorder %v92, 255
    %vm1622 = vcmp.ne.s32.totalorder %v93, 255
    %vm1623 = vcmp.ne.s32.totalorder %v94, 255
    %v1624 = vsel %vm1608, 1, 0
    %v1625 = vsel %vm1609, 1, 0
    %v1626 = vsel %vm1610, 1, 0
    %v1627 = vsel %vm1611, 1, 0
    %v1628 = vsel %vm1612, 1, 0
    %v1629 = vsel %vm1613, 1, 0
    %v1630 = vsel %vm1614, 1, 0
    %v1631 = vsel %vm1615, 1, 0
    %v1632 = vsel %vm1616, 1, 0
    %v1633 = vsel %vm1617, 1, 0
    %v1634 = vsel %vm1618, 1, 0
    %v1635 = vsel %vm1619, 1, 0
    %v1636 = vsel %vm1620, 1, 0
    %v1637 = vsel %vm1621, 1, 0
    %v1638 = vsel %vm1622, 1, 0
    %v1639 = vsel %vm1623, 1, 0
    %v1640 = vcvt.s32.f32 %v1624
    %v1641 = vcvt.s32.f32 %v1625
    %v1642 = vcvt.s32.f32 %v1626
    %v1643 = vcvt.s32.f32 %v1627
    %v1644 = vcvt.s32.f32 %v1628
    %v1645 = vcvt.s32.f32 %v1629
    %v1646 = vcvt.s32.f32 %v1630
    %v1647 = vcvt.s32.f32 %v1631
    %v1648 = vcvt.s32.f32 %v1632
    %v1649 = vcvt.s32.f32 %v1633
    %v1650 = vcvt.s32.f32 %v1634
    %v1651 = vcvt.s32.f32 %v1635
    %v1652 = vcvt.s32.f32 %v1636
    %v1653 = vcvt.s32.f32 %v1637
    %v1654 = vcvt.s32.f32 %v1638
    %v1655 = vcvt.s32.f32 %v1639
    %v1656 = vsub.f32 0.0, %v1390
    %v1657 = vsub.f32 0.0, %v1397
    %v1658 = vsub.f32 0.0, %v1404
    %v1659 = vsub.f32 0.0, %v1411
    %v1660 = vsub.f32 0.0, %v1418
    %v1661 = vsub.f32 0.0, %v1425
    %v1662 = vsub.f32 0.0, %v1432
    %v1663 = vsub.f32 0.0, %v1439
    %v1664 = vsub.f32 0.0, %v1446
    %v1665 = vsub.f32 0.0, %v1453
    %v1666 = vsub.f32 0.0, %v1460
    %v1667 = vsub.f32 0.0, %v1467
    %v1668 = vsub.f32 0.0, %v1474
    %v1669 = vsub.f32 0.0, %v1481
    %v1670 = vsub.f32 0.0, %v1488
    %v1671 = vsub.f32 0.0, %v1495
    %v1672 = vsub.f32 0.0, %v1502
    %v1673 = vsub.f32 0.0, %v1509
    %v1674 = vsub.f32 0.0, %v1516
    %v1675 = vsub.f32 0.0, %v1523
    %v1676 = vsub.f32 0.0, %v1530
    %v1677 = vsub.f32 0.0, %v1537
    %v1678 = vsub.f32 0.0, %v1544
    %v1679 = vsub.f32 0.0, %v1551
    %v1680 = vsub.f32 0.0, %v1558
    %v1681 = vsub.f32 0.0, %v1565
    %v1682 = vsub.f32 0.0, %v1572
    %v1683 = vsub.f32 0.0, %v1579
    %v1684 = vsub.f32 0.0, %v1586
    %v1685 = vsub.f32 0.0, %v1593
    %v1686 = vsub.f32 0.0, %v1600
    %v1687 = vsub.f32 0.0, %v1607
    %v1688 = vsub.f32 %v1129, %v754
    %v1689 = vsub.f32 %v1136, %v756
    %v1690 = vsub.f32 %v1143, %v758
    %v1691 = vsub.f32 %v1150, %v760
    %v1692 = vsub.f32 %v1157, %v762
    %v1693 = vsub.f32 %v1164, %v764
    %v1694 = vsub.f32 %v1171, %v766
    %v1695 = vsub.f32 %v1178, %v768
    %v1696 = vsub.f32 %v1185, %v770
    %v1697 = vsub.f32 %v1192, %v772
    %v1698 = vsub.f32 %v1199, %v774
    %v1699 = vsub.f32 %v1206, %v776
    %v1700 = vsub.f32 %v1213, %v778
    %v1701 = vsub.f32 %v1220, %v780
    %v1702 = vsub.f32 %v1227, %v782
    %v1703 = vsub.f32 %v1234, %v784
    %v1704 = vsub.f32 %v1241, %v786
    %v1705 = vsub.f32 %v1248, %v788
    %v1706 = vsub.f32 %v1255, %v790
    %v1707 = vsub.f32 %v1262, %v792
    %v1708 = vsub.f32 %v1269, %v794
    %v1709 = vsub.f32 %v1276, %v796
    %v1710 = vsub.f32 %v1283, %v798
    %v1711 = vsub.f32 %v1290, %v800
    %v1712 = vsub.f32 %v1297, %v802
    %v1713 = vsub.f32 %v1304, %v804
    %v1714 = vsub.f32 %v1311, %v806
    %v1715 = vsub.f32 %v1318, %v808
    %v1716 = vsub.f32 %v1325, %v810
    %v1717 = vsub.f32 %v1332, %v812
    %v1718 = vsub.f32 %v1339, %v814
    %v1719 = vsub.f32 %v1346, %v816
    %v1720 = vmul.f32 %v1656, %v1688
    %v1721 = vmul.f32 %v1657, %v1689
    %v1722 = vmul.f32 %v1658, %v1690
    %v1723 = vmul.f32 %v1659, %v1691
    %v1724 = vmul.f32 %v1660, %v1692
    %v1725 = vmul.f32 %v1661, %v1693
    %v1726 = vmul.f32 %v1662, %v1694
    %v1727 = vmul.f32 %v1663, %v1695
    %v1728 = vmul.f32 %v1664, %v1696
    %v1729 = vmul.f32 %v1665, %v1697
    %v1730 = vmul.f32 %v1666, %v1698
    %v1731 = vmul.f32 %v1667, %v1699
    %v1732 = vmul.f32 %v1668, %v1700
    %v1733 = vmul.f32 %v1669, %v1701
    %v1734 = vmul.f32 %v1670, %v1702
    %v1735 = vmul.f32 %v1671, %v1703
    %v1736 = vmul.f32 %v1672, %v1704
    %v1737 = vmul.f32 %v1673, %v1705
    %v1738 = vmul.f32 %v1674, %v1706
    %v1739 = vmul.f32 %v1675, %v1707
    %v1740 = vmul.f32 %v1676, %v1708
    %v1741 = vmul.f32 %v1677, %v1709
    %v1742 = vmul.f32 %v1678, %v1710
    %v1743 = vmul.f32 %v1679, %v1711
    %v1744 = vmul.f32 %v1680, %v1712
    %v1745 = vmul.f32 %v1681, %v1713
    %v1746 = vmul.f32 %v1682, %v1714
    %v1747 = vmul.f32 %v1683, %v1715
    %v1748 = vmul.f32 %v1684, %v1716
    %v1749 = vmul.f32 %v1685, %v1717
    %v1750 = vmul.f32 %v1686, %v1718
    %v1751 = vmul.f32 %v1687, %v1719
    %v1768 = vlaneseq
    %v1769 = vshrl.u32 %v1768, 7
    %v1770 = vsub.s32 0, %v1769
    %v1771 = vrot.slane %v1640, %v1770
    %v1772 = vlaneseq
    %v1773 = vshrl.u32 %v1772, 7
    %v1774 = vsub.s32 1, %v1773
    %v1775 = vrot.slane %v1640, %v1774
    %v1776 = vlaneseq
    %v1777 = vshrl.u32 %v1776, 7
    %v1778 = vsub.s32 0, %v1777
    %v1779 = vrot.slane %v1641, %v1778
    %v1780 = vlaneseq
    %v1781 = vshrl.u32 %v1780, 7
    %v1782 = vsub.s32 1, %v1781
    %v1783 = vrot.slane %v1641, %v1782
    %v1784 = vlaneseq
    %v1785 = vshrl.u32 %v1784, 7
    %v1786 = vsub.s32 0, %v1785
    %v1787 = vrot.slane %v1642, %v1786
    %v1788 = vlaneseq
    %v1789 = vshrl.u32 %v1788, 7
    %v1790 = vsub.s32 1, %v1789
    %v1791 = vrot.slane %v1642, %v1790
    %v1792 = vlaneseq
    %v1793 = vshrl.u32 %v1792, 7
    %v1794 = vsub.s32 0, %v1793
    %v1795 = vrot.slane %v1643, %v1794
    %v1796 = vlaneseq
    %v1797 = vshrl.u32 %v1796, 7
    %v1798 = vsub.s32 1, %v1797
    %v1799 = vrot.slane %v1643, %v1798
    %v1800 = vlaneseq
    %v1801 = vshrl.u32 %v1800, 7
    %v1802 = vsub.s32 0, %v1801
    %v1803 = vrot.slane %v1644, %v1802
    %v1804 = vlaneseq
    %v1805 = vshrl.u32 %v1804, 7
    %v1806 = vsub.s32 1, %v1805
    %v1807 = vrot.slane %v1644, %v1806
    %v1808 = vlaneseq
    %v1809 = vshrl.u32 %v1808, 7
    %v1810 = vsub.s32 0, %v1809
    %v1811 = vrot.slane %v1645, %v1810
    %v1812 = vlaneseq
    %v1813 = vshrl.u32 %v1812, 7
    %v1814 = vsub.s32 1, %v1813
    %v1815 = vrot.slane %v1645, %v1814
    %v1816 = vlaneseq
    %v1817 = vshrl.u32 %v1816, 7
    %v1818 = vsub.s32 0, %v1817
    %v1819 = vrot.slane %v1646, %v1818
    %v1820 = vlaneseq
    %v1821 = vshrl.u32 %v1820, 7
    %v1822 = vsub.s32 1, %v1821
    %v1823 = vrot.slane %v1646, %v1822
    %v1824 = vlaneseq
    %v1825 = vshrl.u32 %v1824, 7
    %v1826 = vsub.s32 0, %v1825
    %v1827 = vrot.slane %v1647, %v1826
    %v1828 = vlaneseq
    %v1829 = vshrl.u32 %v1828, 7
    %v1830 = vsub.s32 1, %v1829
    %v1831 = vrot.slane %v1647, %v1830
    %v1832 = vlaneseq
    %v1833 = vshrl.u32 %v1832, 7
    %v1834 = vsub.s32 0, %v1833
    %v1835 = vrot.slane %v1648, %v1834
    %v1836 = vlaneseq
    %v1837 = vshrl.u32 %v1836, 7
    %v1838 = vsub.s32 1, %v1837
    %v1839 = vrot.slane %v1648, %v1838
    %v1840 = vlaneseq
    %v1841 = vshrl.u32 %v1840, 7
    %v1842 = vsub.s32 0, %v1841
    %v1843 = vrot.slane %v1649, %v1842
    %v1844 = vlaneseq
    %v1845 = vshrl.u32 %v1844, 7
    %v1846 = vsub.s32 1, %v1845
    %v1847 = vrot.slane %v1649, %v1846
    %v1848 = vlaneseq
    %v1849 = vshrl.u32 %v1848, 7
    %v1850 = vsub.s32 0, %v1849
    %v1851 = vrot.slane %v1650, %v1850
    %v1852 = vlaneseq
    %v1853 = vshrl.u32 %v1852, 7
    %v1854 = vsub.s32 1, %v1853
    %v1855 = vrot.slane %v1650, %v1854
    %v1856 = vlaneseq
    %v1857 = vshrl.u32 %v1856, 7
    %v1858 = vsub.s32 0, %v1857
    %v1859 = vrot.slane %v1651, %v1858
    %v1860 = vlaneseq
    %v1861 = vshrl.u32 %v1860, 7
    %v1862 = vsub.s32 1, %v1861
    %v1863 = vrot.slane %v1651, %v1862
    %v1864 = vlaneseq
    %v1865 = vshrl.u32 %v1864, 7
    %v1866 = vsub.s32 0, %v1865
    %v1867 = vrot.slane %v1652, %v1866
    %v1868 = vlaneseq
    %v1869 = vshrl.u32 %v1868, 7
    %v1870 = vsub.s32 1, %v1869
    %v1871 = vrot.slane %v1652, %v1870
    %v1872 = vlaneseq
    %v1873 = vshrl.u32 %v1872, 7
    %v1874 = vsub.s32 0, %v1873
    %v1875 = vrot.slane %v1653, %v1874
    %v1876 = vlaneseq
    %v1877 = vshrl.u32 %v1876, 7
    %v1878 = vsub.s32 1, %v1877
    %v1879 = vrot.slane %v1653, %v1878
    %v1880 = vlaneseq
    %v1881 = vshrl.u32 %v1880, 7
    %v1882 = vsub.s32 0, %v1881
    %v1883 = vrot.slane %v1654, %v1882
    %v1884 = vlaneseq
    %v1885 = vshrl.u32 %v1884, 7
    %v1886 = vsub.s32 1, %v1885
    %v1887 = vrot.slane %v1654, %v1886
    %v1888 = vlaneseq
    %v1889 = vshrl.u32 %v1888, 7
    %v1890 = vsub.s32 0, %v1889
    %v1891 = vrot.slane %v1655, %v1890
    %v1892 = vlaneseq
    %v1893 = vshrl.u32 %v1892, 7
    %v1894 = vsub.s32 1, %v1893
    %v1895 = vrot.slane %v1655, %v1894
    %v1928 = vmul.f32 %v1720, %v1771
    %v1929 = vmul.f32 %v1721, %v1775
    %v1930 = vmul.f32 %v1722, %v1779
    %v1931 = vmul.f32 %v1723, %v1783
    %v1932 = vmul.f32 %v1724, %v1787
    %v1933 = vmul.f32 %v1725, %v1791
    %v1934 = vmul.f32 %v1726, %v1795
    %v1935 = vmul.f32 %v1727, %v1799
    %v1936 = vmul.f32 %v1728, %v1803
    %v1937 = vmul.f32 %v1729, %v1807
    %v1938 = vmul.f32 %v1730, %v1811
    %v1939 = vmul.f32 %v1731, %v1815
    %v1940 = vmul.f32 %v1732, %v1819
    %v1941 = vmul.f32 %v1733, %v1823
    %v1942 = vmul.f32 %v1734, %v1827
    %v1943 = vmul.f32 %v1735, %v1831
    %v1944 = vmul.f32 %v1736, %v1835
    %v1945 = vmul.f32 %v1737, %v1839
    %v1946 = vmul.f32 %v1738, %v1843
    %v1947 = vmul.f32 %v1739, %v1847
    %v1948 = vmul.f32 %v1740, %v1851
    %v1949 = vmul.f32 %v1741, %v1855
    %v1950 = vmul.f32 %v1742, %v1859
    %v1951 = vmul.f32 %v1743, %v1863
    %v1952 = vmul.f32 %v1744, %v1867
    %v1953 = vmul.f32 %v1745, %v1871
    %v1954 = vmul.f32 %v1746, %v1875
    %v1955 = vmul.f32 %v1747, %v1879
    %v1956 = vmul.f32 %v1748, %v1883
    %v1957 = vmul.f32 %v1749, %v1887
    %v1958 = vmul.f32 %v1750, %v1891
    %v1959 = vmul.f32 %v1751, %v1895
    %v1960 = vld [vmem:[#allocation2] sm:$0x1]
    %v1961 = vld [vmem:[#allocation2 + $0x1] sm:$0x1]
    %v1962 = vld [vmem:[#allocation2 + $0x2] sm:$0x1]
    %v1963 = vld [vmem:[#allocation2 + $0x3] sm:$0x1]
    %v1964 = vld [vmem:[#allocation2 + $0x4] sm:$0x1]
    %v1965 = vld [vmem:[#allocation2 + $0x5] sm:$0x1]
    %v1966 = vld [vmem:[#allocation2 + $0x6] sm:$0x1]
    %v1967 = vld [vmem:[#allocation2 + $0x7] sm:$0x1]
    %v1968 = vld [vmem:[#allocation2 + $0x8] sm:$0x1]
    %v1969 = vld [vmem:[#allocation2 + $0x9] sm:$0x1]
    %v1970 = vld [vmem:[#allocation2 + $0xa] sm:$0x1]
    %v1971 = vld [vmem:[#allocation2 + $0xb] sm:$0x1]
    %v1972 = vld [vmem:[#allocation2 + $0xc] sm:$0x1]
    %v1973 = vld [vmem:[#allocation2 + $0xd] sm:$0x1]
    %v1974 = vld [vmem:[#allocation2 + $0xe] sm:$0x1]
    %v1975 = vld [vmem:[#allocation2 + $0xf] sm:$0x1]
    %vm1976 = vcmask 1040384
    %v1977 = vsel %vm1976, %v1928, 0.0
    %v1978 = vsel %vm1976, %v1929, 0.0
    %v1979 = vadd.f32 %v1977, %v1978
    %1980 = vadd.xlane.f32.xlu0 %v1979
    %v1981 = vpop.xlane.xlu0 %1980
    %v1982 = vsel %vm1976, %v1930, 0.0
    %v1983 = vsel %vm1976, %v1931, 0.0
    %v1984 = vadd.f32 %v1982, %v1983
    %1985 = vadd.xlane.f32.xlu0 %v1984
    %v1986 = vpop.xlane.xlu0 %1985
    %v1987 = vsel %vm1976, %v1932, 0.0
    %v1988 = vsel %vm1976, %v1933, 0.0
    %v1989 = vadd.f32 %v1987, %v1988
    %1990 = vadd.xlane.f32.xlu0 %v1989
    %v1991 = vpop.xlane.xlu0 %1990
    %v1992 = vsel %vm1976, %v1934, 0.0
    %v1993 = vsel %vm1976, %v1935, 0.0
    %v1994 = vadd.f32 %v1992, %v1993
    %1995 = vadd.xlane.f32.xlu0 %v1994
    %v1996 = vpop.xlane.xlu0 %1995
    %v1997 = vsel %vm1976, %v1936, 0.0
    %v1998 = vsel %vm1976, %v1937, 0.0
    %v1999 = vadd.f32 %v1997, %v1998
    %2000 = vadd.xlane.f32.xlu0 %v1999
    %v2001 = vpop.xlane.xlu0 %2000
    %v2002 = vsel %vm1976, %v1938, 0.0
    %v2003 = vsel %vm1976, %v1939, 0.0
    %v2004 = vadd.f32 %v2002, %v2003
    %2005 = vadd.xlane.f32.xlu0 %v2004
    %v2006 = vpop.xlane.xlu0 %2005
    %v2007 = vsel %vm1976, %v1940, 0.0
    %v2008 = vsel %vm1976, %v1941, 0.0
    %v2009 = vadd.f32 %v2007, %v2008
    %2010 = vadd.xlane.f32.xlu0 %v2009
    %v2011 = vpop.xlane.xlu0 %2010
    %v2012 = vsel %vm1976, %v1942, 0.0
    %v2013 = vsel %vm1976, %v1943, 0.0
    %v2014 = vadd.f32 %v2012, %v2013
    %2015 = vadd.xlane.f32.xlu0 %v2014
    %v2016 = vpop.xlane.xlu0 %2015
    %v2017 = vsel %vm1976, %v1944, 0.0
    %v2018 = vsel %vm1976, %v1945, 0.0
    %v2019 = vadd.f32 %v2017, %v2018
    %2020 = vadd.xlane.f32.xlu0 %v2019
    %v2021 = vpop.xlane.xlu0 %2020
    %v2022 = vsel %vm1976, %v1946, 0.0
    %v2023 = vsel %vm1976, %v1947, 0.0
    %v2024 = vadd.f32 %v2022, %v2023
    %2025 = vadd.xlane.f32.xlu0 %v2024
    %v2026 = vpop.xlane.xlu0 %2025
    %v2027 = vsel %vm1976, %v1948, 0.0
    %v2028 = vsel %vm1976, %v1949, 0.0
    %v2029 = vadd.f32 %v2027, %v2028
    %2030 = vadd.xlane.f32.xlu0 %v2029
    %v2031 = vpop.xlane.xlu0 %2030
    %v2032 = vsel %vm1976, %v1950, 0.0
    %v2033 = vsel %vm1976, %v1951, 0.0
    %v2034 = vadd.f32 %v2032, %v2033
    %2035 = vadd.xlane.f32.xlu0 %v2034
    %v2036 = vpop.xlane.xlu0 %2035
    %v2037 = vsel %vm1976, %v1952, 0.0
    %v2038 = vsel %vm1976, %v1953, 0.0
    %v2039 = vadd.f32 %v2037, %v2038
    %2040 = vadd.xlane.f32.xlu0 %v2039
    %v2041 = vpop.xlane.xlu0 %2040
    %v2042 = vsel %vm1976, %v1954, 0.0
    %v2043 = vsel %vm1976, %v1955, 0.0
    %v2044 = vadd.f32 %v2042, %v2043
    %2045 = vadd.xlane.f32.xlu0 %v2044
    %v2046 = vpop.xlane.xlu0 %2045
    %v2047 = vsel %vm1976, %v1956, 0.0
    %v2048 = vsel %vm1976, %v1957, 0.0
    %v2049 = vadd.f32 %v2047, %v2048
    %2050 = vadd.xlane.f32.xlu0 %v2049
    %v2051 = vpop.xlane.xlu0 %2050
    %v2052 = vsel %vm1976, %v1958, 0.0
    %v2053 = vsel %vm1976, %v1959, 0.0
    %v2054 = vadd.f32 %v2052, %v2053
    %2055 = vadd.xlane.f32.xlu0 %v2054
    %v2056 = vpop.xlane.xlu0 %2055
    %v2057 = vadd.f32 %v1960, %v1981
    %v2058 = vadd.f32 %v1961, %v1986
    %v2059 = vadd.f32 %v1962, %v1991
    %v2060 = vadd.f32 %v1963, %v1996
    %v2061 = vadd.f32 %v1964, %v2001
    %v2062 = vadd.f32 %v1965, %v2006
    %v2063 = vadd.f32 %v1966, %v2011
    %v2064 = vadd.f32 %v1967, %v2016
    %v2065 = vadd.f32 %v1968, %v2021
    %v2066 = vadd.f32 %v1969, %v2026
    %v2067 = vadd.f32 %v1970, %v2031
    %v2068 = vadd.f32 %v1971, %v2036
    %v2069 = vadd.f32 %v1972, %v2041
    %v2070 = vadd.f32 %v1973, %v2046
    %v2071 = vadd.f32 %v1974, %v2051
    %v2072 = vadd.f32 %v1975, %v2056
    %vm2073 = vcmask 0
    %2074 = vst.msk [vmem:[#allocation2] sm:$0x1] %vm2073, %v2057
    %2075 = vst.msk [vmem:[#allocation2 + $0x1] sm:$0x1] %vm2073, %v2058
    %2076 = vst.msk [vmem:[#allocation2 + $0x2] sm:$0x1] %vm2073, %v2059
    %2077 = vst.msk [vmem:[#allocation2 + $0x3] sm:$0x1] %vm2073, %v2060
    %2078 = vst.msk [vmem:[#allocation2 + $0x4] sm:$0x1] %vm2073, %v2061
    %2079 = vst.msk [vmem:[#allocation2 + $0x5] sm:$0x1] %vm2073, %v2062
    %2080 = vst.msk [vmem:[#allocation2 + $0x6] sm:$0x1] %vm2073, %v2063
    %2081 = vst.msk [vmem:[#allocation2 + $0x7] sm:$0x1] %vm2073, %v2064
    %2082 = vst.msk [vmem:[#allocation2 + $0x8] sm:$0x1] %vm2073, %v2065
    %2083 = vst.msk [vmem:[#allocation2 + $0x9] sm:$0x1] %vm2073, %v2066
    %2084 = vst.msk [vmem:[#allocation2 + $0xa] sm:$0x1] %vm2073, %v2067
    %2085 = vst.msk [vmem:[#allocation2 + $0xb] sm:$0x1] %vm2073, %v2068
    %2086 = vst.msk [vmem:[#allocation2 + $0xc] sm:$0x1] %vm2073, %v2069
    %2087 = vst.msk [vmem:[#allocation2 + $0xd] sm:$0x1] %vm2073, %v2070
    %2088 = vst.msk [vmem:[#allocation2 + $0xe] sm:$0x1] %vm2073, %v2071
    %2089 = vst.msk [vmem:[#allocation2 + $0xf] sm:$0x1] %vm2073, %v2072
    // Predicated region
    $region26: #{tpu_custom_call.1} parent=1 // pred_check
      %p2090 = pneg %p42
    $region27: #{tpu_custom_call.1} parent=1 // pred_check_branch
      %2092 = sbr.rel (%p2090) target = $region29
    $region28: #{tpu_custom_call.1} parent=1 // pred_region
      %v2093 = vld [vmem:[#allocation2] sm:$0x1]
      %v2094 = vld [vmem:[#allocation2 + $0x1] sm:$0x1]
      %v2095 = vld [vmem:[#allocation2 + $0x2] sm:$0x1]
      %v2096 = vld [vmem:[#allocation2 + $0x3] sm:$0x1]
      %v2097 = vld [vmem:[#allocation2 + $0x4] sm:$0x1]
      %v2098 = vld [vmem:[#allocation2 + $0x5] sm:$0x1]
      %v2099 = vld [vmem:[#allocation2 + $0x6] sm:$0x1]
      %v2100 = vld [vmem:[#allocation2 + $0x7] sm:$0x1]
      %v2101 = vld [vmem:[#allocation2 + $0x8] sm:$0x1]
      %v2102 = vld [vmem:[#allocation2 + $0x9] sm:$0x1]
      %v2103 = vld [vmem:[#allocation2 + $0xa] sm:$0x1]
      %v2104 = vld [vmem:[#allocation2 + $0xb] sm:$0x1]
      %v2105 = vld [vmem:[#allocation2 + $0xc] sm:$0x1]
      %v2106 = vld [vmem:[#allocation2 + $0xd] sm:$0x1]
      %v2107 = vld [vmem:[#allocation2 + $0xe] sm:$0x1]
      %v2108 = vld [vmem:[#allocation2 + $0xf] sm:$0x1]
      %2109 = vst.msk [vmem:[%s3] sm:$0x1] %vm2073, %v2093
      %2110 = vst.msk [vmem:[%s3 + $0x1] sm:$0x1] %vm2073, %v2094
      %2111 = vst.msk [vmem:[%s3 + $0x2] sm:$0x1] %vm2073, %v2095
      %2112 = vst.msk [vmem:[%s3 + $0x3] sm:$0x1] %vm2073, %v2096
      %2113 = vst.msk [vmem:[%s3 + $0x4] sm:$0x1] %vm2073, %v2097
      %2114 = vst.msk [vmem:[%s3 + $0x5] sm:$0x1] %vm2073, %v2098
      %2115 = vst.msk [vmem:[%s3 + $0x6] sm:$0x1] %vm2073, %v2099
      %2116 = vst.msk [vmem:[%s3 + $0x7] sm:$0x1] %vm2073, %v2100
      %2117 = vst.msk [vmem:[%s3 + $0x8] sm:$0x1] %vm2073, %v2101
      %2118 = vst.msk [vmem:[%s3 + $0x9] sm:$0x1] %vm2073, %v2102
      %2119 = vst.msk [vmem:[%s3 + $0xa] sm:$0x1] %vm2073, %v2103
      %2120 = vst.msk [vmem:[%s3 + $0xb] sm:$0x1] %vm2073, %v2104
      %2121 = vst.msk [vmem:[%s3 + $0xc] sm:$0x1] %vm2073, %v2105
      %2122 = vst.msk [vmem:[%s3 + $0xd] sm:$0x1] %vm2073, %v2106
      %2123 = vst.msk [vmem:[%s3 + $0xe] sm:$0x1] %vm2073, %v2107
      %2124 = vst.msk [vmem:[%s3 + $0xf] sm:$0x1] %vm2073, %v2108
    $region29: #{tpu_custom_call.1} parent=1 // pred_fallthru
      _
    // Predicated region
    $region30: #{tpu_custom_call.1} parent=1 // pred_check
      _
    $region31: #{tpu_custom_call.1} parent=1 // pred_check_branch
      %2126 = sbr.rel (0) target = $region33
    $region32: #{tpu_custom_call.1} parent=1 // pred_region
      _
    $region33: #{tpu_custom_call.1} parent=1 // pred_fallthru
      _
    // Predicated region
    $region34: #{tpu_custom_call.1} parent=1 // pred_check
      _
    $region35: #{tpu_custom_call.1} parent=1 // pred_check_branch
      %2128 = sbr.rel (0) target = $region37
    $region36: #{tpu_custom_call.1} parent=1 // pred_region
      _
    $region37: #{tpu_custom_call.1} parent=1 // pred_fallthru
      _
    %2129 = vsyncpa [#allocation4], 1
    %2130 = vsyncpa [#allocation6], 1

</llo_original>
